<compile_context>
chip_gen: v7x
topology: tpu7x:2x2x1
jax: 0.10.0
libtpu: 0.0.40
codegen_flags: <defaults>
</compile_context>

<pallas_src>
import functools

import jax
import jax.numpy as jnp
from jax import lax
from jax.experimental import pallas as pl
from jax.experimental.pallas import tpu as pltpu


# ----------------------------------------------------------------------------
# Fused Pallas kernel: whole forward pass in one call
# ----------------------------------------------------------------------------
def _fused_forward_kernel(*refs, n_prep, conv_lens, n_post, negative_slope):
    """refs layout (inputs, then one output):
         src  [E, 1] int32   source node index per edge
         dst  [1, E] int32   destination node index per edge
         x    [N, in_c] f32  node features
         ea   [E, D] f32     edge attributes
         then (w, b) pairs in order:
           prep MLP, then per GINE layer (edge_lin, conv MLP pairs, skip),
           then post MLP
         o    [N, out_dim] f32
    """
    it = iter(refs)
    src_ref = next(it)
    dst_ref = next(it)
    x_ref = next(it)
    ea_ref = next(it)

    def nxt_pair():
        return next(it), next(it)

    prep = [nxt_pair() for _ in range(n_prep)]
    edge_lin, conv_mlps, skips = [], [], []
    for ch_len in conv_lens:
        edge_lin.append(nxt_pair())
        conv_mlps.append([nxt_pair() for _ in range(ch_len)])
        skips.append(nxt_pair())
    post = [nxt_pair() for _ in range(n_post)]
    o_ref = next(it)

    e = src_ref.shape[0]
    n = x_ref.shape[0]

    # --- one-hot gather/scatter matrices: built ONCE, reused every layer ----
    # onehot_src[edge, node] = (src[edge] == node)
    onehot_src = (src_ref[...] ==
                  lax.broadcasted_iota(jnp.int32, (e, n), 1)).astype(jnp.float32)
    # onehot_dst[node, edge] = (dst[edge] == node)   (iota along node axis!)
    onehot_dst = (lax.broadcasted_iota(jnp.int32, (n, e), 0) ==
                  dst_ref[...]).astype(jnp.float32)

    def linear(v, wb, act):
        w_ref, b_ref = wb
        y = jnp.dot(v, w_ref[...], preferred_element_type=jnp.float32)
        y = y + b_ref[...]
        if act == "leaky_relu":
            y = jnp.where(y > 0, y, negative_slope * y)
        elif act == "tanh":
            y = jnp.tanh(y)
        return y

    x = x_ref[...].astype(jnp.float32)
    ea = ea_ref[...].astype(jnp.float32)

    # --- prep MLP ------------------------------------------------------------
    for i, wb in enumerate(prep):
        act = "tanh" if (i == n_prep - 1 and n_prep >= 2) else "leaky_relu"
        x = linear(x, wb, act)

    # --- GINE layers with skip connections -----------------------------------
    for li, ch_len in enumerate(conv_lens):
        r = x
        # edge embedding: depends only on (constant) edge_attr and this layer's
        # weights -> computed exactly once per layer.
        e_emb = linear(ea, edge_lin[li], "none")
        # gather x[src] via one-hot matmul   [E,N] @ [N,F]
        x_src = jnp.dot(onehot_src, x, preferred_element_type=jnp.float32)
        msg = jnp.maximum(x_src + e_emb, 0.0)          # relu(x_j + lin(e_ij))
        # scatter-add to destination         [N,E] @ [E,F]
        agg = jnp.dot(onehot_dst, msg, preferred_element_type=jnp.float32)
        h = agg + x                                     # + (1 + eps) * x, eps=0
        # conv MLP
        for j, wb in enumerate(conv_mlps[li]):
            act = "tanh" if (j == ch_len - 1 and ch_len >= 2) else "leaky_relu"
            h = linear(h, wb, act)
        # skip linear + residual add, fused in the same kernel
        s = linear(r, skips[li], "tanh")
        x = h + s

    # --- post MLP: LeakyReLU on every hidden layer, Tanh on the last ---------
    for i, wb in enumerate(post):
        act = "tanh" if i == n_post - 1 else "leaky_relu"
        x = linear(x, wb, act)

    o_ref[...] = x


# ----------------------------------------------------------------------------
# Parameter construction (deterministic, PyTorch-like uniform init)
# ----------------------------------------------------------------------------
def _init_linear(key, fan_in, fan_out):
    kw, kb = jax.random.split(key)
    bound = 1.0 / jnp.sqrt(jnp.float32(fan_in))
    w = jax.random.uniform(kw, (fan_in, fan_out), jnp.float32, -bound, bound)
    b = jax.random.uniform(kb, (fan_out,), jnp.float32, -bound, bound)
    return w, b


def build_params(key, in_channels, edge_dim, layers_features_prep,
                 gine_mlp_channels, layers_features_post):
    keys = iter(jax.random.split(key, 64))
    params = {"prep": [], "edge_lin": [], "conv_mlp": [], "skip": [], "post": []}

    dims = [in_channels] + list(layers_features_prep)
    for i in range(len(layers_features_prep)):
        params["prep"].append(_init_linear(next(keys), dims[i], dims[i + 1]))

    prev = layers_features_prep[-1] if layers_features_prep else in_channels
    for ch in gine_mlp_channels:
        params["edge_lin"].append(_init_linear(next(keys), edge_dim, prev))
        mlp_dims = [prev] + list(ch)
        params["conv_mlp"].append(
            [_init_linear(next(keys), mlp_dims[j], mlp_dims[j + 1])
             for j in range(len(ch))])
        params["skip"].append(_init_linear(next(keys), prev, ch[-1]))
        prev = ch[-1]

    dims = [prev] + list(layers_features_post)
    for i in range(len(layers_features_post)):
        params["post"].append(_init_linear(next(keys), dims[i], dims[i + 1]))

    return params


# ----------------------------------------------------------------------------
# Wrapper: one fused pallas_call for the entire forward
# ----------------------------------------------------------------------------
def gine_encoder_forward(params, x, src, dst, edge_attr, negative_slope=0.01):
    n, _ = x.shape
    e = edge_attr.shape[0]
    conv_lens = tuple(len(m) for m in params["conv_mlp"])

    # flatten parameters in the order the kernel expects
    flat = []

    def add(wb):
        w, b = wb
        flat.append(w)
        flat.append(b.reshape(1, -1))

    for wb in params["prep"]:
        add(wb)
    for li in range(len(conv_lens)):
        add(params["edge_lin"][li])
        for wb in params["conv_mlp"][li]:
            add(wb)
        add(params["skip"][li])
    for wb in params["post"]:
        add(wb)

    # output feature dim
    if params["post"]:
        out_dim = params["post"][-1][0].shape[1]
    elif params["conv_mlp"]:
        out_dim = params["conv_mlp"][-1][-1][0].shape[1]
    elif params["prep"]:
        out_dim = params["prep"][-1][0].shape[1]
    else:
        out_dim = x.shape[1]

    # --- advisory cost estimate ----------------------------------------------
    flops = 0
    transcendentals = 0

    def _lin_cost(rows, w, act):
        f = 2 * rows * w.shape[0] * w.shape[1] + rows * w.shape[1]
        t = rows * w.shape[1] if act == "tanh" else 0
        return f, t

    n_prep = len(params["prep"])
    for i, (w, _) in enumerate(params["prep"]):
        f, t = _lin_cost(n, w, "tanh" if (i == n_prep - 1 and n_prep >= 2) else "lrelu")
        flops += f
        transcendentals += t
    for li, mlp in enumerate(params["conv_mlp"]):
        we, _ = params["edge_lin"][li]
        f, _ = _lin_cost(e, we, "none")
        flops += f
        flops += 2 * 2 * e * n * we.shape[1]          # one-hot gather + scatter
        for j, (w, _) in enumerate(mlp):
            f, t = _lin_cost(n, w, "tanh" if (j == len(mlp) - 1 and len(mlp) >= 2) else "lrelu")
            flops += f
            transcendentals += t
        ws, _ = params["skip"][li]
        f, t = _lin_cost(n, ws, "tanh")
        flops += f
        transcendentals += t
    n_post = len(params["post"])
    for i, (w, _) in enumerate(params["post"]):
        f, t = _lin_cost(n, w, "tanh" if i == n_post - 1 else "lrelu")
        flops += f
        transcendentals += t

    bytes_accessed = (sum(int(a.size) * 4 for a in flat)
                      + int(x.size) * 4 + int(edge_attr.size) * 4
                      + int(src.size) * 4 + int(dst.size) * 4
                      + n * out_dim * 4)

    num_inputs = 4 + len(flat)
    kernel = functools.partial(
        _fused_forward_kernel,
        n_prep=n_prep,
        conv_lens=conv_lens,
        n_post=n_post,
        negative_slope=negative_slope,
    )
    return pl.pallas_call(
        kernel,
        out_shape=jax.ShapeDtypeStruct((n, out_dim), jnp.float32),
        in_specs=[pl.BlockSpec(memory_space=pltpu.MemorySpace.VMEM)] * num_inputs,
        out_specs=pl.BlockSpec(memory_space=pltpu.MemorySpace.VMEM),
        compiler_params=pltpu.CompilerParams(vmem_limit_bytes=8 * 1024 * 1024),
        cost_estimate=pl.CostEstimate(
            flops=int(flops),
            transcendentals=int(transcendentals),
            bytes_accessed=int(bytes_accessed),
        ),
    )(src, dst, x, edge_attr, *flat)


# ----------------------------------------------------------------------------
# Pure-JAX reference (for a correctness check against the fused kernel)
# ----------------------------------------------------------------------------
def gine_encoder_reference(params, x, src_idx, dst_idx, edge_attr,
                           negative_slope=0.01):
    def lin(v, wb, act):
        w, b = wb
        y = v @ w + b
        if act == "leaky_relu":
            y = jnp.where(y > 0, y, negative_slope * y)
        elif act == "tanh":
            y = jnp.tanh(y)
        return y

    n_prep = len(params["prep"])
    for i, wb in enumerate(params["prep"]):
        act = "tanh" if (i == n_prep - 1 and n_prep >= 2) else "leaky_relu"
        x = lin(x, wb, act)

    n = x.shape[0]
    for li, mlp in enumerate(params["conv_mlp"]):
        r = x
        e_emb = lin(edge_attr, params["edge_lin"][li], "none")
        msg = jnp.maximum(x[src_idx] + e_emb, 0.0)
        agg = jnp.zeros((n, x.shape[1]), jnp.float32).at[dst_idx].add(msg)
        h = agg + x
        for j, wb in enumerate(mlp):
            act = "tanh" if (j == len(mlp) - 1 and len(mlp) >= 2) else "leaky_relu"
            h = lin(h, wb, act)
        s = lin(r, params["skip"][li], "tanh")
        x = h + s

    n_post = len(params["post"])
    for i, wb in enumerate(params["post"]):
        act = "tanh" if i == n_post - 1 else "leaky_relu"
        x = lin(x, wb, act)
    return x


# ----------------------------------------------------------------------------
if __name__ == "__main__":
    # Module configuration (small, consistent with __init__ signature)
    in_channels = 4
    edge_dim = 3
    layers_features_prep = [8, 16]
    gine_mlp_channels = [[16, 16], [16, 16]]
    layers_features_post = [16, 8]
    negative_slope = 0.01
    # dropout > 0 is identity in eval mode; TODO(synk): training-mode dropout not implemented.

    N, E = 8, 16

    key = jax.random.PRNGKey(0)
    k_x, k_ei, k_ew, k_params = jax.random.split(key, 4)

    x = jax.random.normal(k_x, (N, in_channels), jnp.float32)
    edge_index = jax.random.randint(k_ei, (2, E), 0, N, jnp.int32)
    edge_weight = jax.random.normal(k_ew, (E, edge_dim), jnp.float32)

    src_idx = edge_index[0].astype(jnp.int32)              # message source j
    dst_idx = edge_index[1].astype(jnp.int32)              # aggregation target i
    src = src_idx.reshape(E, 1)
    dst = dst_idx.reshape(1, E)

    params = build_params(k_params, in_channels, edge_dim,
                          layers_features_prep, gine_mlp_channels,
                          layers_features_post)

    out = gine_encoder_forward(params, x, src, dst, edge_weight, negative_slope)
    out = jax.block_until_ready(out)
    assert out.shape == (N, layers_features_post[-1])

    ref = gine_encoder_reference(params, x, src_idx, dst_idx, edge_weight,
                                 negative_slope)
    assert bool(jnp.allclose(out, ref, rtol=2e-3, atol=2e-3)), \
        "Pallas kernel output does not match pure-JAX reference"

    print("KERNEL_OK")
</pallas_src>

<mosaic_0001>
module attributes {stable_mosaic.version = 11 : i64} {
  func.func @_fused_forward_kernel(%arg0: memref<16x1xi32, #tpu.memory_space<vmem>>, %arg1: memref<1x16xi32, #tpu.memory_space<vmem>>, %arg2: memref<8x4xf32, #tpu.memory_space<vmem>>, %arg3: memref<16x3xf32, #tpu.memory_space<vmem>>, %arg4: memref<4x8xf32, #tpu.memory_space<vmem>>, %arg5: memref<1x8xf32, #tpu.memory_space<vmem>>, %arg6: memref<8x16xf32, #tpu.memory_space<vmem>>, %arg7: memref<1x16xf32, #tpu.memory_space<vmem>>, %arg8: memref<3x16xf32, #tpu.memory_space<vmem>>, %arg9: memref<1x16xf32, #tpu.memory_space<vmem>>, %arg10: memref<16x16xf32, #tpu.memory_space<vmem>>, %arg11: memref<1x16xf32, #tpu.memory_space<vmem>>, %arg12: memref<16x16xf32, #tpu.memory_space<vmem>>, %arg13: memref<1x16xf32, #tpu.memory_space<vmem>>, %arg14: memref<16x16xf32, #tpu.memory_space<vmem>>, %arg15: memref<1x16xf32, #tpu.memory_space<vmem>>, %arg16: memref<3x16xf32, #tpu.memory_space<vmem>>, %arg17: memref<1x16xf32, #tpu.memory_space<vmem>>, %arg18: memref<16x16xf32, #tpu.memory_space<vmem>>, %arg19: memref<1x16xf32, #tpu.memory_space<vmem>>, %arg20: memref<16x16xf32, #tpu.memory_space<vmem>>, %arg21: memref<1x16xf32, #tpu.memory_space<vmem>>, %arg22: memref<16x16xf32, #tpu.memory_space<vmem>>, %arg23: memref<1x16xf32, #tpu.memory_space<vmem>>, %arg24: memref<16x16xf32, #tpu.memory_space<vmem>>, %arg25: memref<1x16xf32, #tpu.memory_space<vmem>>, %arg26: memref<16x8xf32, #tpu.memory_space<vmem>>, %arg27: memref<1x8xf32, #tpu.memory_space<vmem>>, %arg28: memref<8x8xf32, #tpu.memory_space<vmem>>) attributes {dimension_semantics = [], scalar_prefetch = 0 : i64, scratch_operands = 0 : i64, tpu.core_type = #tpu.core_type<tc>} {
    %c0 = arith.constant 0 : index
    %c0_0 = arith.constant 0 : index
    %0 = vector.load %arg0[%c0, %c0_0] : memref<16x1xi32, #tpu.memory_space<vmem>>, vector<16x1xi32>
    %1 = tpu.iota {dimensions = array<i32: 1>} : vector<16x8xi32>
    %2 = vector.broadcast %0 : vector<16x1xi32> to vector<16x8xi32>
    %3 = arith.cmpi eq, %2, %1 : vector<16x8xi32>
    %4 = arith.extui %3 : vector<16x8xi1> to vector<16x8xi32>
    %5 = arith.sitofp %4 : vector<16x8xi32> to vector<16x8xf32>
    %6 = tpu.iota {dimensions = array<i32: 0>} : vector<8x16xi32>
    %c0_1 = arith.constant 0 : index
    %c0_2 = arith.constant 0 : index
    %7 = vector.load %arg1[%c0_1, %c0_2] : memref<1x16xi32, #tpu.memory_space<vmem>>, vector<1x16xi32>
    %8 = vector.broadcast %7 : vector<1x16xi32> to vector<8x16xi32>
    %9 = arith.cmpi eq, %6, %8 : vector<8x16xi32>
    %10 = arith.extui %9 : vector<8x16xi1> to vector<8x16xi32>
    %11 = arith.sitofp %10 : vector<8x16xi32> to vector<8x16xf32>
    %c0_3 = arith.constant 0 : index
    %c0_4 = arith.constant 0 : index
    %12 = vector.load %arg2[%c0_3, %c0_4] : memref<8x4xf32, #tpu.memory_space<vmem>>, vector<8x4xf32>
    %c0_5 = arith.constant 0 : index
    %c0_6 = arith.constant 0 : index
    %13 = vector.load %arg3[%c0_5, %c0_6] : memref<16x3xf32, #tpu.memory_space<vmem>>, vector<16x3xf32>
    %c0_7 = arith.constant 0 : index
    %c0_8 = arith.constant 0 : index
    %14 = vector.load %arg4[%c0_7, %c0_8] : memref<4x8xf32, #tpu.memory_space<vmem>>, vector<4x8xf32>
    %cst = arith.constant dense<0.000000e+00> : vector<8x8xf32>
    %15 = tpu.matmul %12, %14, %cst {dimension_numbers = #tpu.dot_dimension_numbers<[1], [0], [0], [1], [0, 0, 1, 1], [], []>} : vector<8x4xf32>, vector<4x8xf32>, vector<8x8xf32> -> vector<8x8xf32>
    %c0_9 = arith.constant 0 : index
    %c0_10 = arith.constant 0 : index
    %16 = vector.load %arg5[%c0_9, %c0_10] : memref<1x8xf32, #tpu.memory_space<vmem>>, vector<1x8xf32>
    %17 = vector.broadcast %16 : vector<1x8xf32> to vector<8x8xf32>
    %18 = arith.addf %15, %17 : vector<8x8xf32>
    %cst_11 = arith.constant 0.000000e+00 : f32
    %19 = vector.broadcast %cst_11 : f32 to vector<8x8xf32>
    %20 = arith.cmpf ogt, %18, %19 : vector<8x8xf32>
    %cst_12 = arith.constant 0.00999999977 : f32
    %21 = vector.broadcast %cst_12 : f32 to vector<8x8xf32>
    %22 = arith.mulf %21, %18 : vector<8x8xf32>
    %23 = arith.select %20, %18, %22 : vector<8x8xi1>, vector<8x8xf32>
    %c0_13 = arith.constant 0 : index
    %c0_14 = arith.constant 0 : index
    %24 = vector.load %arg6[%c0_13, %c0_14] : memref<8x16xf32, #tpu.memory_space<vmem>>, vector<8x16xf32>
    %cst_15 = arith.constant dense<0.000000e+00> : vector<8x16xf32>
    %25 = tpu.matmul %23, %24, %cst_15 {dimension_numbers = #tpu.dot_dimension_numbers<[1], [0], [0], [1], [0, 0, 1, 1], [], []>} : vector<8x8xf32>, vector<8x16xf32>, vector<8x16xf32> -> vector<8x16xf32>
    %c0_16 = arith.constant 0 : index
    %c0_17 = arith.constant 0 : index
    %26 = vector.load %arg7[%c0_16, %c0_17] : memref<1x16xf32, #tpu.memory_space<vmem>>, vector<1x16xf32>
    %27 = vector.broadcast %26 : vector<1x16xf32> to vector<8x16xf32>
    %28 = arith.addf %25, %27 : vector<8x16xf32>
    %29 = math.tanh %28 : vector<8x16xf32>
    %c0_18 = arith.constant 0 : index
    %c0_19 = arith.constant 0 : index
    %30 = vector.load %arg8[%c0_18, %c0_19] : memref<3x16xf32, #tpu.memory_space<vmem>>, vector<3x16xf32>
    %cst_20 = arith.constant dense<0.000000e+00> : vector<16x16xf32>
    %31 = tpu.matmul %13, %30, %cst_20 {dimension_numbers = #tpu.dot_dimension_numbers<[1], [0], [0], [1], [0, 0, 1, 1], [], []>} : vector<16x3xf32>, vector<3x16xf32>, vector<16x16xf32> -> vector<16x16xf32>
    %c0_21 = arith.constant 0 : index
    %c0_22 = arith.constant 0 : index
    %32 = vector.load %arg9[%c0_21, %c0_22] : memref<1x16xf32, #tpu.memory_space<vmem>>, vector<1x16xf32>
    %33 = vector.broadcast %32 : vector<1x16xf32> to vector<16x16xf32>
    %34 = arith.addf %31, %33 : vector<16x16xf32>
    %cst_23 = arith.constant dense<0.000000e+00> : vector<16x16xf32>
    %35 = tpu.matmul %5, %29, %cst_23 {dimension_numbers = #tpu.dot_dimension_numbers<[1], [0], [0], [1], [0, 0, 1, 1], [], []>} : vector<16x8xf32>, vector<8x16xf32>, vector<16x16xf32> -> vector<16x16xf32>
    %36 = arith.addf %35, %34 : vector<16x16xf32>
    %cst_24 = arith.constant 0.000000e+00 : f32
    %37 = vector.broadcast %cst_24 : f32 to vector<16x16xf32>
    %38 = arith.maximumf %36, %37 : vector<16x16xf32>
    %cst_25 = arith.constant dense<0.000000e+00> : vector<8x16xf32>
    %39 = tpu.matmul %11, %38, %cst_25 {dimension_numbers = #tpu.dot_dimension_numbers<[1], [0], [0], [1], [0, 0, 1, 1], [], []>} : vector<8x16xf32>, vector<16x16xf32>, vector<8x16xf32> -> vector<8x16xf32>
    %40 = arith.addf %39, %29 : vector<8x16xf32>
    %c0_26 = arith.constant 0 : index
    %c0_27 = arith.constant 0 : index
    %41 = vector.load %arg10[%c0_26, %c0_27] : memref<16x16xf32, #tpu.memory_space<vmem>>, vector<16x16xf32>
    %cst_28 = arith.constant dense<0.000000e+00> : vector<8x16xf32>
    %42 = tpu.matmul %40, %41, %cst_28 {dimension_numbers = #tpu.dot_dimension_numbers<[1], [0], [0], [1], [0, 0, 1, 1], [], []>} : vector<8x16xf32>, vector<16x16xf32>, vector<8x16xf32> -> vector<8x16xf32>
    %c0_29 = arith.constant 0 : index
    %c0_30 = arith.constant 0 : index
    %43 = vector.load %arg11[%c0_29, %c0_30] : memref<1x16xf32, #tpu.memory_space<vmem>>, vector<1x16xf32>
    %44 = vector.broadcast %43 : vector<1x16xf32> to vector<8x16xf32>
    %45 = arith.addf %42, %44 : vector<8x16xf32>
    %cst_31 = arith.constant 0.000000e+00 : f32
    %46 = vector.broadcast %cst_31 : f32 to vector<8x16xf32>
    %47 = arith.cmpf ogt, %45, %46 : vector<8x16xf32>
    %cst_32 = arith.constant 0.00999999977 : f32
    %48 = vector.broadcast %cst_32 : f32 to vector<8x16xf32>
    %49 = arith.mulf %48, %45 : vector<8x16xf32>
    %50 = arith.select %47, %45, %49 : vector<8x16xi1>, vector<8x16xf32>
    %c0_33 = arith.constant 0 : index
    %c0_34 = arith.constant 0 : index
    %51 = vector.load %arg12[%c0_33, %c0_34] : memref<16x16xf32, #tpu.memory_space<vmem>>, vector<16x16xf32>
    %cst_35 = arith.constant dense<0.000000e+00> : vector<8x16xf32>
    %52 = tpu.matmul %50, %51, %cst_35 {dimension_numbers = #tpu.dot_dimension_numbers<[1], [0], [0], [1], [0, 0, 1, 1], [], []>} : vector<8x16xf32>, vector<16x16xf32>, vector<8x16xf32> -> vector<8x16xf32>
    %c0_36 = arith.constant 0 : index
    %c0_37 = arith.constant 0 : index
    %53 = vector.load %arg13[%c0_36, %c0_37] : memref<1x16xf32, #tpu.memory_space<vmem>>, vector<1x16xf32>
    %54 = vector.broadcast %53 : vector<1x16xf32> to vector<8x16xf32>
    %55 = arith.addf %52, %54 : vector<8x16xf32>
    %56 = math.tanh %55 : vector<8x16xf32>
    %c0_38 = arith.constant 0 : index
    %c0_39 = arith.constant 0 : index
    %57 = vector.load %arg14[%c0_38, %c0_39] : memref<16x16xf32, #tpu.memory_space<vmem>>, vector<16x16xf32>
    %cst_40 = arith.constant dense<0.000000e+00> : vector<8x16xf32>
    %58 = tpu.matmul %29, %57, %cst_40 {dimension_numbers = #tpu.dot_dimension_numbers<[1], [0], [0], [1], [0, 0, 1, 1], [], []>} : vector<8x16xf32>, vector<16x16xf32>, vector<8x16xf32> -> vector<8x16xf32>
    %c0_41 = arith.constant 0 : index
    %c0_42 = arith.constant 0 : index
    %59 = vector.load %arg15[%c0_41, %c0_42] : memref<1x16xf32, #tpu.memory_space<vmem>>, vector<1x16xf32>
    %60 = vector.broadcast %59 : vector<1x16xf32> to vector<8x16xf32>
    %61 = arith.addf %58, %60 : vector<8x16xf32>
    %62 = math.tanh %61 : vector<8x16xf32>
    %63 = arith.addf %56, %62 : vector<8x16xf32>
    %c0_43 = arith.constant 0 : index
    %c0_44 = arith.constant 0 : index
    %64 = vector.load %arg16[%c0_43, %c0_44] : memref<3x16xf32, #tpu.memory_space<vmem>>, vector<3x16xf32>
    %cst_45 = arith.constant dense<0.000000e+00> : vector<16x16xf32>
    %65 = tpu.matmul %13, %64, %cst_45 {dimension_numbers = #tpu.dot_dimension_numbers<[1], [0], [0], [1], [0, 0, 1, 1], [], []>} : vector<16x3xf32>, vector<3x16xf32>, vector<16x16xf32> -> vector<16x16xf32>
    %c0_46 = arith.constant 0 : index
    %c0_47 = arith.constant 0 : index
    %66 = vector.load %arg17[%c0_46, %c0_47] : memref<1x16xf32, #tpu.memory_space<vmem>>, vector<1x16xf32>
    %67 = vector.broadcast %66 : vector<1x16xf32> to vector<16x16xf32>
    %68 = arith.addf %65, %67 : vector<16x16xf32>
    %cst_48 = arith.constant dense<0.000000e+00> : vector<16x16xf32>
    %69 = tpu.matmul %5, %63, %cst_48 {dimension_numbers = #tpu.dot_dimension_numbers<[1], [0], [0], [1], [0, 0, 1, 1], [], []>} : vector<16x8xf32>, vector<8x16xf32>, vector<16x16xf32> -> vector<16x16xf32>
    %70 = arith.addf %69, %68 : vector<16x16xf32>
    %cst_49 = arith.constant 0.000000e+00 : f32
    %71 = vector.broadcast %cst_49 : f32 to vector<16x16xf32>
    %72 = arith.maximumf %70, %71 : vector<16x16xf32>
    %cst_50 = arith.constant dense<0.000000e+00> : vector<8x16xf32>
    %73 = tpu.matmul %11, %72, %cst_50 {dimension_numbers = #tpu.dot_dimension_numbers<[1], [0], [0], [1], [0, 0, 1, 1], [], []>} : vector<8x16xf32>, vector<16x16xf32>, vector<8x16xf32> -> vector<8x16xf32>
    %74 = arith.addf %73, %63 : vector<8x16xf32>
    %c0_51 = arith.constant 0 : index
    %c0_52 = arith.constant 0 : index
    %75 = vector.load %arg18[%c0_51, %c0_52] : memref<16x16xf32, #tpu.memory_space<vmem>>, vector<16x16xf32>
    %cst_53 = arith.constant dense<0.000000e+00> : vector<8x16xf32>
    %76 = tpu.matmul %74, %75, %cst_53 {dimension_numbers = #tpu.dot_dimension_numbers<[1], [0], [0], [1], [0, 0, 1, 1], [], []>} : vector<8x16xf32>, vector<16x16xf32>, vector<8x16xf32> -> vector<8x16xf32>
    %c0_54 = arith.constant 0 : index
    %c0_55 = arith.constant 0 : index
    %77 = vector.load %arg19[%c0_54, %c0_55] : memref<1x16xf32, #tpu.memory_space<vmem>>, vector<1x16xf32>
    %78 = vector.broadcast %77 : vector<1x16xf32> to vector<8x16xf32>
    %79 = arith.addf %76, %78 : vector<8x16xf32>
    %cst_56 = arith.constant 0.000000e+00 : f32
    %80 = vector.broadcast %cst_56 : f32 to vector<8x16xf32>
    %81 = arith.cmpf ogt, %79, %80 : vector<8x16xf32>
    %cst_57 = arith.constant 0.00999999977 : f32
    %82 = vector.broadcast %cst_57 : f32 to vector<8x16xf32>
    %83 = arith.mulf %82, %79 : vector<8x16xf32>
    %84 = arith.select %81, %79, %83 : vector<8x16xi1>, vector<8x16xf32>
    %c0_58 = arith.constant 0 : index
    %c0_59 = arith.constant 0 : index
    %85 = vector.load %arg20[%c0_58, %c0_59] : memref<16x16xf32, #tpu.memory_space<vmem>>, vector<16x16xf32>
    %cst_60 = arith.constant dense<0.000000e+00> : vector<8x16xf32>
    %86 = tpu.matmul %84, %85, %cst_60 {dimension_numbers = #tpu.dot_dimension_numbers<[1], [0], [0], [1], [0, 0, 1, 1], [], []>} : vector<8x16xf32>, vector<16x16xf32>, vector<8x16xf32> -> vector<8x16xf32>
    %c0_61 = arith.constant 0 : index
    %c0_62 = arith.constant 0 : index
    %87 = vector.load %arg21[%c0_61, %c0_62] : memref<1x16xf32, #tpu.memory_space<vmem>>, vector<1x16xf32>
    %88 = vector.broadcast %87 : vector<1x16xf32> to vector<8x16xf32>
    %89 = arith.addf %86, %88 : vector<8x16xf32>
    %90 = math.tanh %89 : vector<8x16xf32>
    %c0_63 = arith.constant 0 : index
    %c0_64 = arith.constant 0 : index
    %91 = vector.load %arg22[%c0_63, %c0_64] : memref<16x16xf32, #tpu.memory_space<vmem>>, vector<16x16xf32>
    %cst_65 = arith.constant dense<0.000000e+00> : vector<8x16xf32>
    %92 = tpu.matmul %63, %91, %cst_65 {dimension_numbers = #tpu.dot_dimension_numbers<[1], [0], [0], [1], [0, 0, 1, 1], [], []>} : vector<8x16xf32>, vector<16x16xf32>, vector<8x16xf32> -> vector<8x16xf32>
    %c0_66 = arith.constant 0 : index
    %c0_67 = arith.constant 0 : index
    %93 = vector.load %arg23[%c0_66, %c0_67] : memref<1x16xf32, #tpu.memory_space<vmem>>, vector<1x16xf32>
    %94 = vector.broadcast %93 : vector<1x16xf32> to vector<8x16xf32>
    %95 = arith.addf %92, %94 : vector<8x16xf32>
    %96 = math.tanh %95 : vector<8x16xf32>
    %97 = arith.addf %90, %96 : vector<8x16xf32>
    %c0_68 = arith.constant 0 : index
    %c0_69 = arith.constant 0 : index
    %98 = vector.load %arg24[%c0_68, %c0_69] : memref<16x16xf32, #tpu.memory_space<vmem>>, vector<16x16xf32>
    %cst_70 = arith.constant dense<0.000000e+00> : vector<8x16xf32>
    %99 = tpu.matmul %97, %98, %cst_70 {dimension_numbers = #tpu.dot_dimension_numbers<[1], [0], [0], [1], [0, 0, 1, 1], [], []>} : vector<8x16xf32>, vector<16x16xf32>, vector<8x16xf32> -> vector<8x16xf32>
    %c0_71 = arith.constant 0 : index
    %c0_72 = arith.constant 0 : index
    %100 = vector.load %arg25[%c0_71, %c0_72] : memref<1x16xf32, #tpu.memory_space<vmem>>, vector<1x16xf32>
    %101 = vector.broadcast %100 : vector<1x16xf32> to vector<8x16xf32>
    %102 = arith.addf %99, %101 : vector<8x16xf32>
    %cst_73 = arith.constant 0.000000e+00 : f32
    %103 = vector.broadcast %cst_73 : f32 to vector<8x16xf32>
    %104 = arith.cmpf ogt, %102, %103 : vector<8x16xf32>
    %cst_74 = arith.constant 0.00999999977 : f32
    %105 = vector.broadcast %cst_74 : f32 to vector<8x16xf32>
    %106 = arith.mulf %105, %102 : vector<8x16xf32>
    %107 = arith.select %104, %102, %106 : vector<8x16xi1>, vector<8x16xf32>
    %c0_75 = arith.constant 0 : index
    %c0_76 = arith.constant 0 : index
    %108 = vector.load %arg26[%c0_75, %c0_76] : memref<16x8xf32, #tpu.memory_space<vmem>>, vector<16x8xf32>
    %cst_77 = arith.constant dense<0.000000e+00> : vector<8x8xf32>
    %109 = tpu.matmul %107, %108, %cst_77 {dimension_numbers = #tpu.dot_dimension_numbers<[1], [0], [0], [1], [0, 0, 1, 1], [], []>} : vector<8x16xf32>, vector<16x8xf32>, vector<8x8xf32> -> vector<8x8xf32>
    %c0_78 = arith.constant 0 : index
    %c0_79 = arith.constant 0 : index
    %110 = vector.load %arg27[%c0_78, %c0_79] : memref<1x8xf32, #tpu.memory_space<vmem>>, vector<1x8xf32>
    %111 = vector.broadcast %110 : vector<1x8xf32> to vector<8x8xf32>
    %112 = arith.addf %109, %111 : vector<8x8xf32>
    %113 = math.tanh %112 : vector<8x8xf32>
    %c0_80 = arith.constant 0 : index
    %c0_81 = arith.constant 0 : index
    %114 = vector.load %arg28[%c0_80, %c0_81] : memref<8x8xf32, #tpu.memory_space<vmem>>, vector<8x8xf32>
    tpu.vector_store %arg28[%c0_80, %c0_81], %113 {strides = array<i32>} : memref<8x8xf32, #tpu.memory_space<vmem>>, vector<8x8xf32>,
    return
  }
}

</mosaic_0001>

<llo_original>
// kernel: tpu_custom_call.1
$region0: #{tpu_custom_call.1}
  #allocation0 [shape = 'u32[]', space=smem, size = 0x4, offset = 0x4, fixed_abs, tag = 'smem constant byte address 0x4 - core index']
  #allocation1 [shape = 'u32[144,128]{1,0:T(1,128)}', space=vmem, size = 0x12000, scoped, tag = 'internal scratch']
  %s0 = inlined_call_operand.vmem [shape: s32[16,1], index: 0, kind: input, shape index: {}]
  %s1 = inlined_call_operand.hbm [shape: s32[1,16], index: 1, kind: input, shape index: {}]
  %s2 = inlined_call_operand.vmem [shape: f32[8,4], index: 2, kind: input, shape index: {}]
  %s3 = inlined_call_operand.vmem [shape: f32[16,3], index: 3, kind: input, shape index: {}]
  %s4 = inlined_call_operand.hbm [shape: f32[4,8], index: 4, kind: input, shape index: {}]
  %s5 = inlined_call_operand.vmem [shape: f32[1,8], index: 5, kind: input, shape index: {}]
  %s6 = inlined_call_operand.hbm [shape: f32[8,16], index: 6, kind: input, shape index: {}]
  %s7 = inlined_call_operand.vmem [shape: f32[1,16], index: 7, kind: input, shape index: {}]
  %s8 = inlined_call_operand.hbm [shape: f32[3,16], index: 8, kind: input, shape index: {}]
  %s9 = inlined_call_operand.hbm [shape: f32[1,16], index: 9, kind: input, shape index: {}]
  %s10 = inlined_call_operand.vmem [shape: f32[16,16], index: 10, kind: input, shape index: {}]
  %s11 = inlined_call_operand.hbm [shape: f32[1,16], index: 11, kind: input, shape index: {}]
  %s12 = inlined_call_operand.vmem [shape: f32[16,16], index: 12, kind: input, shape index: {}]
  %s13 = inlined_call_operand.hbm [shape: f32[1,16], index: 13, kind: input, shape index: {}]
  %s14 = inlined_call_operand.vmem [shape: f32[16,16], index: 14, kind: input, shape index: {}]
  %s15 = inlined_call_operand.vmem [shape: f32[1,16], index: 15, kind: input, shape index: {}]
  %s16 = inlined_call_operand.vmem [shape: f32[3,16], index: 16, kind: input, shape index: {}]
  %s17 = inlined_call_operand.vmem [shape: f32[1,16], index: 17, kind: input, shape index: {}]
  %s18 = inlined_call_operand.vmem [shape: f32[16,16], index: 18, kind: input, shape index: {}]
  %s19 = inlined_call_operand.vmem [shape: f32[1,16], index: 19, kind: input, shape index: {}]
  %s20 = inlined_call_operand.vmem [shape: f32[16,16], index: 20, kind: input, shape index: {}]
  %s21 = inlined_call_operand.vmem [shape: f32[1,16], index: 21, kind: input, shape index: {}]
  %s22 = inlined_call_operand.vmem [shape: f32[16,16], index: 22, kind: input, shape index: {}]
  %s23 = inlined_call_operand.vmem [shape: f32[1,16], index: 23, kind: input, shape index: {}]
  %s24 = inlined_call_operand.vmem [shape: f32[16,16], index: 24, kind: input, shape index: {}]
  %s25 = inlined_call_operand.vmem [shape: f32[1,16], index: 25, kind: input, shape index: {}]
  %s26 = inlined_call_operand.vmem [shape: f32[16,8], index: 26, kind: input, shape index: {}]
  %s27 = inlined_call_operand.vmem [shape: f32[1,8], index: 27, kind: input, shape index: {}]
  %s28 = inlined_call_operand.hbm [shape: f32[8,8], index: 28, kind: output, shape index: {}]
  %s29 = sld [smem:[#allocation0]]
  $region150: #{tpu_custom_call.1} parent=0
    _
  %s31 = ssub.s32 1, %s29
  %s32 = scalar_select 0, %s31, %s29
  $region1: #{tpu_custom_call.1} parent=0
    #allocation2 [shape = 'u8[512]{0}', space=vmem, size = 0x400, scoped, tag = 'input window, operand 1, single buffered']
    #allocation3 [shape = 's32[1]{0}', space=sflag, size = 0x4, scoped, tag = 'scoped memory for tpu_custom_call.1']
    #allocation4 [shape = 's32[1]{0}', space=sflag, size = 0x4, scoped, tag = 'scoped memory for tpu_custom_call.1']
    #allocation5 [shape = 'u8[2048]{0}', space=vmem, size = 0x800, scoped, tag = 'input window, operand 4, single buffered']
    #allocation6 [shape = 's32[1]{0}', space=sflag, size = 0x4, scoped, tag = 'scoped memory for tpu_custom_call.1']
    #allocation7 [shape = 'u8[4096]{0}', space=vmem, size = 0x1000, scoped, tag = 'input window, operand 6, single buffered']
    #allocation8 [shape = 'u8[2048]{0}', space=vmem, size = 0x800, scoped, tag = 'input window, operand 8, single buffered']
    #allocation9 [shape = 's32[1]{0}', space=sflag, size = 0x4, scoped, tag = 'scoped memory for tpu_custom_call.1']
    #allocation10 [shape = 'u8[512]{0}', space=vmem, size = 0x400, scoped, tag = 'input window, operand 9, single buffered']
    #allocation11 [shape = 'u8[512]{0}', space=vmem, size = 0x400, scoped, tag = 'input window, operand 11, single buffered']
    #allocation12 [shape = 's32[1]{0}', space=sflag, size = 0x4, scoped, tag = 'scoped memory for tpu_custom_call.1']
    #allocation13 [shape = 'u8[512]{0}', space=vmem, size = 0x400, scoped, tag = 'input window, operand 13, single buffered']
    #allocation14 [shape = 'u8[4096]{0}', space=vmem, size = 0x1000, scoped, tag = 'output window, operand 0, single buffered']
    %33 = vsyncpa [#allocation3], 0
    %34 = vsyncpa [#allocation6], 0
    %35 = vsyncpa [#allocation9], 0
    %36 = vsyncpa [#allocation12], 0
    %37 = vsyncpa [#allocation4], 0
    // Predicated region
    $region2: #{tpu_custom_call.1} parent=1 // pred_check
      _
    $region3: #{tpu_custom_call.1} parent=1 // pred_check_branch
      %39 = sbr.rel (0) target = $region5
    $region4: #{tpu_custom_call.1} parent=1 // pred_region
      _
    $region5: #{tpu_custom_call.1} parent=1 // pred_fallthru
      _
    // Predicated region
    $region6: #{tpu_custom_call.1} parent=1 // pred_check
      _
    $region7: #{tpu_custom_call.1} parent=1 // pred_check_branch
      %41 = sbr.rel (0) target = $region9
    $region8: #{tpu_custom_call.1} parent=1 // pred_region
      %s43 = ssub.s32 16, 16
      %44 = vsyncadd [#allocation3], %s43
      %s46 = sshll.u32 [#allocation2], 4
      %s47 = int_to_ptr.vmem [resolvable:$true] %s46
      %49 = dma.hbm_to_vmem [thread:$0]  %s1, 16, %s47, [#allocation3]
    $region9: #{tpu_custom_call.1} parent=1 // pred_fallthru
      _
    // Predicated region
    $region10: #{tpu_custom_call.1} parent=1 // pred_check
      _
    $region11: #{tpu_custom_call.1} parent=1 // pred_check_branch
      %51 = sbr.rel (0) target = $region13
    $region12: #{tpu_custom_call.1} parent=1 // pred_region
      _
    $region13: #{tpu_custom_call.1} parent=1 // pred_fallthru
      _
    // Predicated region
    $region14: #{tpu_custom_call.1} parent=1 // pred_check
      _
    $region15: #{tpu_custom_call.1} parent=1 // pred_check_branch
      %53 = sbr.rel (0) target = $region17
    $region16: #{tpu_custom_call.1} parent=1 // pred_region
      _
    $region17: #{tpu_custom_call.1} parent=1 // pred_fallthru
      _
    // Predicated region
    $region18: #{tpu_custom_call.1} parent=1 // pred_check
      _
    $region19: #{tpu_custom_call.1} parent=1 // pred_check_branch
      %55 = sbr.rel (0) target = $region21
    $region20: #{tpu_custom_call.1} parent=1 // pred_region
      %s57 = ssub.s32 64, 64
      %58 = vsyncadd [#allocation6], %s57
      %s60 = sshll.u32 [#allocation5], 4
      %s61 = int_to_ptr.vmem [resolvable:$true] %s60
      %63 = dma.hbm_to_vmem [thread:$0]  %s4, 64, %s61, [#allocation6]
    $region21: #{tpu_custom_call.1} parent=1 // pred_fallthru
      _
    // Predicated region
    $region22: #{tpu_custom_call.1} parent=1 // pred_check
      _
    $region23: #{tpu_custom_call.1} parent=1 // pred_check_branch
      %65 = sbr.rel (0) target = $region25
    $region24: #{tpu_custom_call.1} parent=1 // pred_region
      _
    $region25: #{tpu_custom_call.1} parent=1 // pred_fallthru
      _
    // Predicated region
    $region26: #{tpu_custom_call.1} parent=1 // pred_check
      _
    $region27: #{tpu_custom_call.1} parent=1 // pred_check_branch
      %67 = sbr.rel (0) target = $region29
    $region28: #{tpu_custom_call.1} parent=1 // pred_region
      %s69 = ssub.s32 128, 128
      %70 = vsyncadd [#allocation6], %s69
      %s72 = sshll.u32 [#allocation7], 4
      %s73 = int_to_ptr.vmem [resolvable:$true] %s72
      %75 = dma.hbm_to_vmem [thread:$0]  %s6, 128, %s73, [#allocation6]
    $region29: #{tpu_custom_call.1} parent=1 // pred_fallthru
      _
    // Predicated region
    $region30: #{tpu_custom_call.1} parent=1 // pred_check
      _
    $region31: #{tpu_custom_call.1} parent=1 // pred_check_branch
      %77 = sbr.rel (0) target = $region33
    $region32: #{tpu_custom_call.1} parent=1 // pred_region
      _
    $region33: #{tpu_custom_call.1} parent=1 // pred_fallthru
      _
    // Predicated region
    $region34: #{tpu_custom_call.1} parent=1 // pred_check
      _
    $region35: #{tpu_custom_call.1} parent=1 // pred_check_branch
      %79 = sbr.rel (0) target = $region37
    $region36: #{tpu_custom_call.1} parent=1 // pred_region
      %s81 = ssub.s32 64, 64
      %82 = vsyncadd [#allocation9], %s81
      %s84 = sshll.u32 [#allocation8], 4
      %s85 = int_to_ptr.vmem [resolvable:$true] %s84
      %87 = dma.hbm_to_vmem [thread:$0]  %s8, 64, %s85, [#allocation9]
    $region37: #{tpu_custom_call.1} parent=1 // pred_fallthru
      _
    // Predicated region
    $region38: #{tpu_custom_call.1} parent=1 // pred_check
      _
    $region39: #{tpu_custom_call.1} parent=1 // pred_check_branch
      %89 = sbr.rel (0) target = $region41
    $region40: #{tpu_custom_call.1} parent=1 // pred_region
      %s91 = ssub.s32 16, 16
      %92 = vsyncadd [#allocation9], %s91
      %s94 = sshll.u32 [#allocation10], 4
      %s95 = int_to_ptr.vmem [resolvable:$true] %s94
      %97 = dma.hbm_to_vmem [thread:$0]  %s9, 16, %s95, [#allocation9]
    $region41: #{tpu_custom_call.1} parent=1 // pred_fallthru
      _
    // Predicated region
    $region42: #{tpu_custom_call.1} parent=1 // pred_check
      _
    $region43: #{tpu_custom_call.1} parent=1 // pred_check_branch
      %99 = sbr.rel (0) target = $region45
    $region44: #{tpu_custom_call.1} parent=1 // pred_region
      _
    $region45: #{tpu_custom_call.1} parent=1 // pred_fallthru
      _
    // Predicated region
    $region46: #{tpu_custom_call.1} parent=1 // pred_check
      _
    $region47: #{tpu_custom_call.1} parent=1 // pred_check_branch
      %101 = sbr.rel (0) target = $region49
    $region48: #{tpu_custom_call.1} parent=1 // pred_region
      %s103 = ssub.s32 16, 16
      %104 = vsyncadd [#allocation12], %s103
      %s106 = sshll.u32 [#allocation11], 4
      %s107 = int_to_ptr.vmem [resolvable:$true] %s106
      %109 = dma.hbm_to_vmem [thread:$0]  %s11, 16, %s107, [#allocation12]
    $region49: #{tpu_custom_call.1} parent=1 // pred_fallthru
      _
    // Predicated region
    $region50: #{tpu_custom_call.1} parent=1 // pred_check
      _
    $region51: #{tpu_custom_call.1} parent=1 // pred_check_branch
      %111 = sbr.rel (0) target = $region53
    $region52: #{tpu_custom_call.1} parent=1 // pred_region
      _
    $region53: #{tpu_custom_call.1} parent=1 // pred_fallthru
      _
    // Predicated region
    $region54: #{tpu_custom_call.1} parent=1 // pred_check
      _
    $region55: #{tpu_custom_call.1} parent=1 // pred_check_branch
      %113 = sbr.rel (0) target = $region57
    $region56: #{tpu_custom_call.1} parent=1 // pred_region
      %s115 = ssub.s32 16, 16
      %116 = vsyncadd [#allocation12], %s115
      %s118 = sshll.u32 [#allocation13], 4
      %s119 = int_to_ptr.vmem [resolvable:$true] %s118
      %121 = dma.hbm_to_vmem [thread:$0]  %s13, 16, %s119, [#allocation12]
    $region57: #{tpu_custom_call.1} parent=1 // pred_fallthru
      _
    // Predicated region
    $region58: #{tpu_custom_call.1} parent=1 // pred_check
      _
    $region59: #{tpu_custom_call.1} parent=1 // pred_check_branch
      %123 = sbr.rel (0) target = $region61
    $region60: #{tpu_custom_call.1} parent=1 // pred_region
      _
    $region61: #{tpu_custom_call.1} parent=1 // pred_fallthru
      _
    // Predicated region
    $region62: #{tpu_custom_call.1} parent=1 // pred_check
      _
    $region63: #{tpu_custom_call.1} parent=1 // pred_check_branch
      %125 = sbr.rel (0) target = $region65
    $region64: #{tpu_custom_call.1} parent=1 // pred_region
      _
    $region65: #{tpu_custom_call.1} parent=1 // pred_fallthru
      _
    // Predicated region
    $region66: #{tpu_custom_call.1} parent=1 // pred_check
      _
    $region67: #{tpu_custom_call.1} parent=1 // pred_check_branch
      %127 = sbr.rel (0) target = $region69
    $region68: #{tpu_custom_call.1} parent=1 // pred_region
      _
    $region69: #{tpu_custom_call.1} parent=1 // pred_fallthru
      _
    // Predicated region
    $region70: #{tpu_custom_call.1} parent=1 // pred_check
      _
    $region71: #{tpu_custom_call.1} parent=1 // pred_check_branch
      %129 = sbr.rel (0) target = $region73
    $region72: #{tpu_custom_call.1} parent=1 // pred_region
      _
    $region73: #{tpu_custom_call.1} parent=1 // pred_fallthru
      _
    // Predicated region
    $region74: #{tpu_custom_call.1} parent=1 // pred_check
      _
    $region75: #{tpu_custom_call.1} parent=1 // pred_check_branch
      %131 = sbr.rel (0) target = $region77
    $region76: #{tpu_custom_call.1} parent=1 // pred_region
      _
    $region77: #{tpu_custom_call.1} parent=1 // pred_fallthru
      _
    // Predicated region
    $region78: #{tpu_custom_call.1} parent=1 // pred_check
      _
    $region79: #{tpu_custom_call.1} parent=1 // pred_check_branch
      %133 = sbr.rel (0) target = $region81
    $region80: #{tpu_custom_call.1} parent=1 // pred_region
      _
    $region81: #{tpu_custom_call.1} parent=1 // pred_fallthru
      _
    // Predicated region
    $region82: #{tpu_custom_call.1} parent=1 // pred_check
      _
    $region83: #{tpu_custom_call.1} parent=1 // pred_check_branch
      %135 = sbr.rel (0) target = $region85
    $region84: #{tpu_custom_call.1} parent=1 // pred_region
      _
    $region85: #{tpu_custom_call.1} parent=1 // pred_fallthru
      _
    // Predicated region
    $region86: #{tpu_custom_call.1} parent=1 // pred_check
      _
    $region87: #{tpu_custom_call.1} parent=1 // pred_check_branch
      %137 = sbr.rel (0) target = $region89
    $region88: #{tpu_custom_call.1} parent=1 // pred_region
      _
    $region89: #{tpu_custom_call.1} parent=1 // pred_fallthru
      _
    // Predicated region
    $region90: #{tpu_custom_call.1} parent=1 // pred_check
      _
    $region91: #{tpu_custom_call.1} parent=1 // pred_check_branch
      %139 = sbr.rel (0) target = $region93
    $region92: #{tpu_custom_call.1} parent=1 // pred_region
      _
    $region93: #{tpu_custom_call.1} parent=1 // pred_fallthru
      _
    // Predicated region
    $region94: #{tpu_custom_call.1} parent=1 // pred_check
      _
    $region95: #{tpu_custom_call.1} parent=1 // pred_check_branch
      %141 = sbr.rel (0) target = $region97
    $region96: #{tpu_custom_call.1} parent=1 // pred_region
      _
    $region97: #{tpu_custom_call.1} parent=1 // pred_fallthru
      _
    // Predicated region
    $region98: #{tpu_custom_call.1} parent=1 // pred_check
      _
    $region99: #{tpu_custom_call.1} parent=1 // pred_check_branch
      %143 = sbr.rel (0) target = $region101
    $region100: #{tpu_custom_call.1} parent=1 // pred_region
      _
    $region101: #{tpu_custom_call.1} parent=1 // pred_fallthru
      _
    // Predicated region
    $region102: #{tpu_custom_call.1} parent=1 // pred_check
      _
    $region103: #{tpu_custom_call.1} parent=1 // pred_check_branch
      %145 = sbr.rel (0) target = $region105
    $region104: #{tpu_custom_call.1} parent=1 // pred_region
      _
    $region105: #{tpu_custom_call.1} parent=1 // pred_fallthru
      _
    // Predicated region
    $region106: #{tpu_custom_call.1} parent=1 // pred_check
      _
    $region107: #{tpu_custom_call.1} parent=1 // pred_check_branch
      %147 = sbr.rel (0) target = $region109
    $region108: #{tpu_custom_call.1} parent=1 // pred_region
      _
    $region109: #{tpu_custom_call.1} parent=1 // pred_fallthru
      _
    // Predicated region
    $region110: #{tpu_custom_call.1} parent=1 // pred_check
      _
    $region111: #{tpu_custom_call.1} parent=1 // pred_check_branch
      %149 = sbr.rel (0) target = $region113
    $region112: #{tpu_custom_call.1} parent=1 // pred_region
      _
    $region113: #{tpu_custom_call.1} parent=1 // pred_fallthru
      _
    // Predicated region
    $region114: #{tpu_custom_call.1} parent=1 // pred_check
      _
    $region115: #{tpu_custom_call.1} parent=1 // pred_check_branch
      %151 = sbr.rel (0) target = $region117
    $region116: #{tpu_custom_call.1} parent=1 // pred_region
      %152 = dma.done [#allocation3], 16
    $region117: #{tpu_custom_call.1} parent=1 // pred_fallthru
      _
    // Predicated region
    $region118: #{tpu_custom_call.1} parent=1 // pred_check
      _
    $region119: #{tpu_custom_call.1} parent=1 // pred_check_branch
      %154 = sbr.rel (0) target = $region121
    $region120: #{tpu_custom_call.1} parent=1 // pred_region
      %155 = dma.done [#allocation6], 64
    $region121: #{tpu_custom_call.1} parent=1 // pred_fallthru
      _
    // Predicated region
    $region122: #{tpu_custom_call.1} parent=1 // pred_check
      _
    $region123: #{tpu_custom_call.1} parent=1 // pred_check_branch
      %157 = sbr.rel (0) target = $region125
    $region124: #{tpu_custom_call.1} parent=1 // pred_region
      %158 = dma.done [#allocation6], 128
    $region125: #{tpu_custom_call.1} parent=1 // pred_fallthru
      _
    // Predicated region
    $region126: #{tpu_custom_call.1} parent=1 // pred_check
      _
    $region127: #{tpu_custom_call.1} parent=1 // pred_check_branch
      %160 = sbr.rel (0) target = $region129
    $region128: #{tpu_custom_call.1} parent=1 // pred_region
      %161 = dma.done [#allocation9], 64
    $region129: #{tpu_custom_call.1} parent=1 // pred_fallthru
      _
    // Predicated region
    $region130: #{tpu_custom_call.1} parent=1 // pred_check
      _
    $region131: #{tpu_custom_call.1} parent=1 // pred_check_branch
      %163 = sbr.rel (0) target = $region133
    $region132: #{tpu_custom_call.1} parent=1 // pred_region
      %164 = dma.done [#allocation9], 16
    $region133: #{tpu_custom_call.1} parent=1 // pred_fallthru
      _
    // Predicated region
    $region134: #{tpu_custom_call.1} parent=1 // pred_check
      _
    $region135: #{tpu_custom_call.1} parent=1 // pred_check_branch
      %166 = sbr.rel (0) target = $region137
    $region136: #{tpu_custom_call.1} parent=1 // pred_region
      %167 = dma.done [#allocation12], 16
    $region137: #{tpu_custom_call.1} parent=1 // pred_fallthru
      _
    // Predicated region
    $region138: #{tpu_custom_call.1} parent=1 // pred_check
      _
    $region139: #{tpu_custom_call.1} parent=1 // pred_check_branch
      %169 = sbr.rel (0) target = $region141
    $region140: #{tpu_custom_call.1} parent=1 // pred_region
      %170 = dma.done [#allocation12], 16
    $region141: #{tpu_custom_call.1} parent=1 // pred_fallthru
      _
    %v171 = vld [vmem:[%s0] sm:$0xff]
    %v172 = vld [vmem:[%s0 + $0x8] sm:$0xff]
    %v173 = vlaneseq
    %v174 = vand.u32 %v173, 127
    %175 = vset.pattern.permute.xlu0 0
    %176 = vperm.xlu0 %175, %v171
    %v177 = vpop.permute.xlu0 %176
    %178 = vset.pattern.permute.xlu0 0
    %179 = vperm.xlu0 %178, %v172
    %v180 = vpop.permute.xlu0 %179
    %vm181 = vcmp.eq.s32.totalorder %v177, %v174
    %vm182 = vcmp.eq.s32.totalorder %v180, %v174
    %v183 = vsel %vm181, 1, 0
    %v184 = vsel %vm182, 1, 0
    %v185 = vcvt.s32.f32 %v183
    %v186 = vcvt.s32.f32 %v184
    %v187 = vlaneseq
    %v188 = vshrl.u32 %v187, 7
    %v189 = vld [vmem:[#allocation2] sm:$0x1]
    %v190 = vlaneseq
    %v191 = vshrl.u32 %v190, 7
    %v192 = vsub.s32 0, %v191
    %v193 = vrot.slane %v189, %v192
    %vm194 = vcmp.eq.s32.totalorder %v188, %v193
    %v195 = vsel %vm194, 1, 0
    %v196 = vcvt.s32.f32 %v195
    %v197 = vld [vmem:[%s2] sm:$0xff]
    %v198 = vld [vmem:[%s3] sm:$0xff]
    %v199 = vld [vmem:[%s3 + $0x8] sm:$0xff]
    %v200 = vld [vmem:[#allocation5] sm:$0xf]
    %v201 = vld [vmem:[%s5] sm:$0x1]
    %v203 = vlaneseq
    %v204 = vshrl.u32 %v203, 7
    %v205 = vsub.s32 0, %v204
    %v206 = vrot.slane %v201, %v205
    %vm208 = vcmask 31744
    %v210 = vsel %vm208, %v197, 0
    %vm212 = vcmask 1043456
    %v214 = vsel %vm212, %v200, 0
    %216 = vmatprep.subr.mxu0 0.0
    %217 = vmatpush1.msra.mxu0 %v214
    %218 = vmatprep.subr.mxu0 0.0
    %219 = vmatpush1.msra.mxu0 0.0
    %220 = vmatprep.subr.mxu0 0.0
    %221 = vmatpush1.msra.mxu0 0.0
    %222 = vmatprep.subr.mxu0 0.0
    %223 = vmatpush1.msra.mxu0 0.0
    %224 = vmatprep.subr.mxu0 0.0
    %225 = vmatpush1.msra.mxu0 0.0
    %226 = vmatprep.subr.mxu0 0.0
    %227 = vmatpush1.msra.mxu0 0.0
    %228 = vmatprep.subr.mxu0 0.0
    %229 = vmatpush1.msra.mxu0 0.0
    %230 = vmatprep.subr.mxu0 0.0
    %231 = vmatpush1.msra.mxu0 0.0
    %232 = vmatprep.subr.mxu0 0.0
    %233 = vmatpush1.msra.mxu0 0.0
    %234 = vmatprep.subr.mxu0 0.0
    %235 = vmatpush1.msra.mxu0 0.0
    %236 = vmatprep.subr.mxu0 0.0
    %237 = vmatpush1.msra.mxu0 0.0
    %238 = vmatprep.subr.mxu0 0.0
    %239 = vmatpush1.msra.mxu0 0.0
    %240 = vmatprep.subr.mxu0 0.0
    %241 = vmatpush1.msra.mxu0 0.0
    %242 = vmatprep.subr.mxu0 0.0
    %243 = vmatpush1.msra.mxu0 0.0
    %244 = vmatprep.subr.mxu0 0.0
    %245 = vmatpush1.msra.mxu0 0.0
    %246 = vmatprep.subr.mxu0 0.0
    %247 = vmatpush1.msra.mxu0 0.0
    %248 = vmatprep.subr.mxu0 0.0
    %249 = vmatpush1.msra.mxu0 0.0
    %250 = vmatprep.subr.mxu0 0.0
    %251 = vmatpush1.msra.mxu0 0.0
    %252 = vmatprep.subr.mxu0 0.0
    %253 = vmatpush1.msra.mxu0 0.0
    %254 = vmatprep.subr.mxu0 0.0
    %255 = vmatpush1.msra.mxu0 0.0
    %256 = vmatprep.subr.mxu0 0.0
    %257 = vmatpush1.msra.mxu0 0.0
    %258 = vmatprep.subr.mxu0 0.0
    %259 = vmatpush1.msra.mxu0 0.0
    %260 = vmatprep.subr.mxu0 0.0
    %261 = vmatpush1.msra.mxu0 0.0
    %262 = vmatprep.subr.mxu0 0.0
    %263 = vmatpush1.msra.mxu0 0.0
    %264 = vmatprep.subr.mxu0 0.0
    %265 = vmatpush1.msra.mxu0 0.0
    %266 = vmatprep.subr.mxu0 0.0
    %267 = vmatpush1.msra.mxu0 0.0
    %268 = vmatprep.subr.mxu0 0.0
    %269 = vmatpush1.msra.mxu0 0.0
    %270 = vmatprep.subr.mxu0 0.0
    %271 = vmatpush1.msra.mxu0 0.0
    %272 = vmatprep.subr.mxu0 0.0
    %273 = vmatpush1.msra.mxu0 0.0
    %274 = vmatprep.subr.mxu0 0.0
    %275 = vmatpush1.msra.mxu0 0.0
    %276 = vmatprep.subr.mxu0 0.0
    %277 = vmatpush1.msra.mxu0 0.0
    %278 = vmatprep.subr.mxu0 0.0
    %279 = vmatpush1.msra.mxu0 0.0
    %280 = vmatprep.mubr.f32.mxu0 0.0
    %281 = vmatmul.mubr.f32.gmra.mrb[0].mxu0 %v210
    %v282 = vpop.f32.mrb[0].mxu0
    %v283 = vadd.f32 %v206, %v282
    %v284 = vpop.f32.mrb[0].mxu0
    %285 = vdwg.mxu0
    %vm286 = vcmp.gt.f32.partialorder %v283, 0.0
    %v287 = vmul.f32 %v283, 0.01
    %v288 = vsel %vm286, %v283, %v287
    %v289 = vld [vmem:[#allocation7] sm:$0xff]
    %v290 = vld [vmem:[%s7] sm:$0x1]
    %v292 = vlaneseq
    %v293 = vshrl.u32 %v292, 7
    %v294 = vsub.s32 0, %v293
    %v295 = vrot.slane %v290, %v294
    %vm297 = vcmask 64512
    %v299 = vsel %vm297, %v288, 0
    %301 = vmatprep.subr.mxu0 0.0
    %302 = vmatpush1.msra.mxu0 %v289
    %303 = vmatprep.subr.mxu0 0.0
    %304 = vmatpush1.msra.mxu0 0.0
    %305 = vmatprep.subr.mxu0 0.0
    %306 = vmatpush1.msra.mxu0 0.0
    %307 = vmatprep.subr.mxu0 0.0
    %308 = vmatpush1.msra.mxu0 0.0
    %309 = vmatprep.subr.mxu0 0.0
    %310 = vmatpush1.msra.mxu0 0.0
    %311 = vmatprep.subr.mxu0 0.0
    %312 = vmatpush1.msra.mxu0 0.0
    %313 = vmatprep.subr.mxu0 0.0
    %314 = vmatpush1.msra.mxu0 0.0
    %315 = vmatprep.subr.mxu0 0.0
    %316 = vmatpush1.msra.mxu0 0.0
    %317 = vmatprep.subr.mxu0 0.0
    %318 = vmatpush1.msra.mxu0 0.0
    %319 = vmatprep.subr.mxu0 0.0
    %320 = vmatpush1.msra.mxu0 0.0
    %321 = vmatprep.subr.mxu0 0.0
    %322 = vmatpush1.msra.mxu0 0.0
    %323 = vmatprep.subr.mxu0 0.0
    %324 = vmatpush1.msra.mxu0 0.0
    %325 = vmatprep.subr.mxu0 0.0
    %326 = vmatpush1.msra.mxu0 0.0
    %327 = vmatprep.subr.mxu0 0.0
    %328 = vmatpush1.msra.mxu0 0.0
    %329 = vmatprep.subr.mxu0 0.0
    %330 = vmatpush1.msra.mxu0 0.0
    %331 = vmatprep.subr.mxu0 0.0
    %332 = vmatpush1.msra.mxu0 0.0
    %333 = vmatprep.subr.mxu0 0.0
    %334 = vmatpush1.msra.mxu0 0.0
    %335 = vmatprep.subr.mxu0 0.0
    %336 = vmatpush1.msra.mxu0 0.0
    %337 = vmatprep.subr.mxu0 0.0
    %338 = vmatpush1.msra.mxu0 0.0
    %339 = vmatprep.subr.mxu0 0.0
    %340 = vmatpush1.msra.mxu0 0.0
    %341 = vmatprep.subr.mxu0 0.0
    %342 = vmatpush1.msra.mxu0 0.0
    %343 = vmatprep.subr.mxu0 0.0
    %344 = vmatpush1.msra.mxu0 0.0
    %345 = vmatprep.subr.mxu0 0.0
    %346 = vmatpush1.msra.mxu0 0.0
    %347 = vmatprep.subr.mxu0 0.0
    %348 = vmatpush1.msra.mxu0 0.0
    %349 = vmatprep.subr.mxu0 0.0
    %350 = vmatpush1.msra.mxu0 0.0
    %351 = vmatprep.subr.mxu0 0.0
    %352 = vmatpush1.msra.mxu0 0.0
    %353 = vmatprep.subr.mxu0 0.0
    %354 = vmatpush1.msra.mxu0 0.0
    %355 = vmatprep.subr.mxu0 0.0
    %356 = vmatpush1.msra.mxu0 0.0
    %357 = vmatprep.subr.mxu0 0.0
    %358 = vmatpush1.msra.mxu0 0.0
    %359 = vmatprep.subr.mxu0 0.0
    %360 = vmatpush1.msra.mxu0 0.0
    %361 = vmatprep.subr.mxu0 0.0
    %362 = vmatpush1.msra.mxu0 0.0
    %363 = vmatprep.subr.mxu0 0.0
    %364 = vmatpush1.msra.mxu0 0.0
    %365 = vmatprep.mubr.f32.mxu0 0.0
    %366 = vmatmul.mubr.f32.gmra.mrb[0].mxu0 %v299
    %v367 = vpop.f32.mrb[0].mxu0
    %v368 = vadd.f32 %v295, %v367
    %v369 = vpop.f32.mrb[0].mxu0
    %370 = vdwg.mxu0
    %v371 = vtanh.pop %v368
    %v372 = vld [vmem:[#allocation8] sm:$0x7]
    %v373 = vld [vmem:[#allocation10] sm:$0x1]
    %v375 = vlaneseq
    %v376 = vshrl.u32 %v375, 7
    %v377 = vsub.s32 0, %v376
    %v378 = vrot.slane %v373, %v377
    %vm380 = vcmask 23552
    %v382 = vsel %vm380, %v198, 0
    %v385 = vsel %vm380, %v199, 0
    %vm387 = vcmask 1042432
    %v389 = vsel %vm387, %v372, 0
    %391 = vmatprep.subr.mxu0 0.0
    %392 = vmatpush1.msra.mxu0 %v389
    %393 = vmatprep.subr.mxu0 0.0
    %394 = vmatpush1.msra.mxu0 0.0
    %395 = vmatprep.subr.mxu0 0.0
    %396 = vmatpush1.msra.mxu0 0.0
    %397 = vmatprep.subr.mxu0 0.0
    %398 = vmatpush1.msra.mxu0 0.0
    %399 = vmatprep.subr.mxu0 0.0
    %400 = vmatpush1.msra.mxu0 0.0
    %401 = vmatprep.subr.mxu0 0.0
    %402 = vmatpush1.msra.mxu0 0.0
    %403 = vmatprep.subr.mxu0 0.0
    %404 = vmatpush1.msra.mxu0 0.0
    %405 = vmatprep.subr.mxu0 0.0
    %406 = vmatpush1.msra.mxu0 0.0
    %407 = vmatprep.subr.mxu0 0.0
    %408 = vmatpush1.msra.mxu0 0.0
    %409 = vmatprep.subr.mxu0 0.0
    %410 = vmatpush1.msra.mxu0 0.0
    %411 = vmatprep.subr.mxu0 0.0
    %412 = vmatpush1.msra.mxu0 0.0
    %413 = vmatprep.subr.mxu0 0.0
    %414 = vmatpush1.msra.mxu0 0.0
    %415 = vmatprep.subr.mxu0 0.0
    %416 = vmatpush1.msra.mxu0 0.0
    %417 = vmatprep.subr.mxu0 0.0
    %418 = vmatpush1.msra.mxu0 0.0
    %419 = vmatprep.subr.mxu0 0.0
    %420 = vmatpush1.msra.mxu0 0.0
    %421 = vmatprep.subr.mxu0 0.0
    %422 = vmatpush1.msra.mxu0 0.0
    %423 = vmatprep.subr.mxu0 0.0
    %424 = vmatpush1.msra.mxu0 0.0
    %425 = vmatprep.subr.mxu0 0.0
    %426 = vmatpush1.msra.mxu0 0.0
    %427 = vmatprep.subr.mxu0 0.0
    %428 = vmatpush1.msra.mxu0 0.0
    %429 = vmatprep.subr.mxu0 0.0
    %430 = vmatpush1.msra.mxu0 0.0
    %431 = vmatprep.subr.mxu0 0.0
    %432 = vmatpush1.msra.mxu0 0.0
    %433 = vmatprep.subr.mxu0 0.0
    %434 = vmatpush1.msra.mxu0 0.0
    %435 = vmatprep.subr.mxu0 0.0
    %436 = vmatpush1.msra.mxu0 0.0
    %437 = vmatprep.subr.mxu0 0.0
    %438 = vmatpush1.msra.mxu0 0.0
    %439 = vmatprep.subr.mxu0 0.0
    %440 = vmatpush1.msra.mxu0 0.0
    %441 = vmatprep.subr.mxu0 0.0
    %442 = vmatpush1.msra.mxu0 0.0
    %443 = vmatprep.subr.mxu0 0.0
    %444 = vmatpush1.msra.mxu0 0.0
    %445 = vmatprep.subr.mxu0 0.0
    %446 = vmatpush1.msra.mxu0 0.0
    %447 = vmatprep.subr.mxu0 0.0
    %448 = vmatpush1.msra.mxu0 0.0
    %449 = vmatprep.subr.mxu0 0.0
    %450 = vmatpush1.msra.mxu0 0.0
    %451 = vmatprep.subr.mxu0 0.0
    %452 = vmatpush1.msra.mxu0 0.0
    %453 = vmatprep.subr.mxu0 0.0
    %454 = vmatpush1.msra.mxu0 0.0
    %455 = vmatprep.mubr.f32.mxu0 0.0
    %456 = vmatmul.mubr.f32.gmra.mrb[0].mxu0 %v382
    %v457 = vpop.f32.mrb[0].mxu0
    %v458 = vadd.f32 %v378, %v457
    %v459 = vpop.f32.mrb[0].mxu0
    %460 = vmatprep.mubr.f32.mxu0 0.0
    %461 = vmatmul.mubr.f32.gmra.mrb[0].mxu0 %v385
    %v462 = vpop.f32.mrb[0].mxu0
    %v463 = vadd.f32 %v378, %v462
    %v464 = vpop.f32.mrb[0].mxu0
    %465 = vdwg.mxu0
    %v467 = vsel %vm297, %v185, 0
    %v470 = vsel %vm297, %v186, 0
    %472 = vmatprep.subr.mxu0 0.0
    %473 = vmatpush1.msra.mxu0 %v371
    %474 = vmatprep.subr.mxu0 0.0
    %475 = vmatpush1.msra.mxu0 0.0
    %476 = vmatprep.subr.mxu0 0.0
    %477 = vmatpush1.msra.mxu0 0.0
    %478 = vmatprep.subr.mxu0 0.0
    %479 = vmatpush1.msra.mxu0 0.0
    %480 = vmatprep.subr.mxu0 0.0
    %481 = vmatpush1.msra.mxu0 0.0
    %482 = vmatprep.subr.mxu0 0.0
    %483 = vmatpush1.msra.mxu0 0.0
    %484 = vmatprep.subr.mxu0 0.0
    %485 = vmatpush1.msra.mxu0 0.0
    %486 = vmatprep.subr.mxu0 0.0
    %487 = vmatpush1.msra.mxu0 0.0
    %488 = vmatprep.subr.mxu0 0.0
    %489 = vmatpush1.msra.mxu0 0.0
    %490 = vmatprep.subr.mxu0 0.0
    %491 = vmatpush1.msra.mxu0 0.0
    %492 = vmatprep.subr.mxu0 0.0
    %493 = vmatpush1.msra.mxu0 0.0
    %494 = vmatprep.subr.mxu0 0.0
    %495 = vmatpush1.msra.mxu0 0.0
    %496 = vmatprep.subr.mxu0 0.0
    %497 = vmatpush1.msra.mxu0 0.0
    %498 = vmatprep.subr.mxu0 0.0
    %499 = vmatpush1.msra.mxu0 0.0
    %500 = vmatprep.subr.mxu0 0.0
    %501 = vmatpush1.msra.mxu0 0.0
    %502 = vmatprep.subr.mxu0 0.0
    %503 = vmatpush1.msra.mxu0 0.0
    %504 = vmatprep.subr.mxu0 0.0
    %505 = vmatpush1.msra.mxu0 0.0
    %506 = vmatprep.subr.mxu0 0.0
    %507 = vmatpush1.msra.mxu0 0.0
    %508 = vmatprep.subr.mxu0 0.0
    %509 = vmatpush1.msra.mxu0 0.0
    %510 = vmatprep.subr.mxu0 0.0
    %511 = vmatpush1.msra.mxu0 0.0
    %512 = vmatprep.subr.mxu0 0.0
    %513 = vmatpush1.msra.mxu0 0.0
    %514 = vmatprep.subr.mxu0 0.0
    %515 = vmatpush1.msra.mxu0 0.0
    %516 = vmatprep.subr.mxu0 0.0
    %517 = vmatpush1.msra.mxu0 0.0
    %518 = vmatprep.subr.mxu0 0.0
    %519 = vmatpush1.msra.mxu0 0.0
    %520 = vmatprep.subr.mxu0 0.0
    %521 = vmatpush1.msra.mxu0 0.0
    %522 = vmatprep.subr.mxu0 0.0
    %523 = vmatpush1.msra.mxu0 0.0
    %524 = vmatprep.subr.mxu0 0.0
    %525 = vmatpush1.msra.mxu0 0.0
    %526 = vmatprep.subr.mxu0 0.0
    %527 = vmatpush1.msra.mxu0 0.0
    %528 = vmatprep.subr.mxu0 0.0
    %529 = vmatpush1.msra.mxu0 0.0
    %530 = vmatprep.subr.mxu0 0.0
    %531 = vmatpush1.msra.mxu0 0.0
    %532 = vmatprep.subr.mxu0 0.0
    %533 = vmatpush1.msra.mxu0 0.0
    %534 = vmatprep.subr.mxu0 0.0
    %535 = vmatpush1.msra.mxu0 0.0
    %536 = vmatprep.mubr.f32.mxu0 0.0
    %537 = vmatmul.mubr.f32.gmra.mrb[0].mxu0 %v467
    %v538 = vpop.f32.mrb[0].mxu0
    %v539 = vadd.f32 %v458, %v538
    %v540 = vpop.f32.mrb[0].mxu0
    %541 = vmatprep.mubr.f32.mxu0 0.0
    %542 = vmatmul.mubr.f32.gmra.mrb[0].mxu0 %v470
    %v543 = vpop.f32.mrb[0].mxu0
    %v544 = vadd.f32 %v463, %v543
    %v545 = vpop.f32.mrb[0].mxu0
    %546 = vdwg.mxu0
    %v547 = vmax.f32 %v539, 0.0
    %v548 = vmax.f32 %v544, 0.0
    %vm549 = vcmask 130048
    %v551 = vsel %vm549, %v196, 0
    %553 = vmatprep.subr.mxu0 0.0
    %554 = vmatpush1.msra.mxu0 %v547
    %555 = vmatprep.subr.mxu0 0.0
    %556 = vmatpush1.msra.mxu0 %v548
    %557 = vmatprep.subr.mxu0 0.0
    %558 = vmatpush1.msra.mxu0 0.0
    %559 = vmatprep.subr.mxu0 0.0
    %560 = vmatpush1.msra.mxu0 0.0
    %561 = vmatprep.subr.mxu0 0.0
    %562 = vmatpush1.msra.mxu0 0.0
    %563 = vmatprep.subr.mxu0 0.0
    %564 = vmatpush1.msra.mxu0 0.0
    %565 = vmatprep.subr.mxu0 0.0
    %566 = vmatpush1.msra.mxu0 0.0
    %567 = vmatprep.subr.mxu0 0.0
    %568 = vmatpush1.msra.mxu0 0.0
    %569 = vmatprep.subr.mxu0 0.0
    %570 = vmatpush1.msra.mxu0 0.0
    %571 = vmatprep.subr.mxu0 0.0
    %572 = vmatpush1.msra.mxu0 0.0
    %573 = vmatprep.subr.mxu0 0.0
    %574 = vmatpush1.msra.mxu0 0.0
    %575 = vmatprep.subr.mxu0 0.0
    %576 = vmatpush1.msra.mxu0 0.0
    %577 = vmatprep.subr.mxu0 0.0
    %578 = vmatpush1.msra.mxu0 0.0
    %579 = vmatprep.subr.mxu0 0.0
    %580 = vmatpush1.msra.mxu0 0.0
    %581 = vmatprep.subr.mxu0 0.0
    %582 = vmatpush1.msra.mxu0 0.0
    %583 = vmatprep.subr.mxu0 0.0
    %584 = vmatpush1.msra.mxu0 0.0
    %585 = vmatprep.subr.mxu0 0.0
    %586 = vmatpush1.msra.mxu0 0.0
    %587 = vmatprep.subr.mxu0 0.0
    %588 = vmatpush1.msra.mxu0 0.0
    %589 = vmatprep.subr.mxu0 0.0
    %590 = vmatpush1.msra.mxu0 0.0
    %591 = vmatprep.subr.mxu0 0.0
    %592 = vmatpush1.msra.mxu0 0.0
    %593 = vmatprep.subr.mxu0 0.0
    %594 = vmatpush1.msra.mxu0 0.0
    %595 = vmatprep.subr.mxu0 0.0
    %596 = vmatpush1.msra.mxu0 0.0
    %597 = vmatprep.subr.mxu0 0.0
    %598 = vmatpush1.msra.mxu0 0.0
    %599 = vmatprep.subr.mxu0 0.0
    %600 = vmatpush1.msra.mxu0 0.0
    %601 = vmatprep.subr.mxu0 0.0
    %602 = vmatpush1.msra.mxu0 0.0
    %603 = vmatprep.subr.mxu0 0.0
    %604 = vmatpush1.msra.mxu0 0.0
    %605 = vmatprep.subr.mxu0 0.0
    %606 = vmatpush1.msra.mxu0 0.0
    %607 = vmatprep.subr.mxu0 0.0
    %608 = vmatpush1.msra.mxu0 0.0
    %609 = vmatprep.subr.mxu0 0.0
    %610 = vmatpush1.msra.mxu0 0.0
    %611 = vmatprep.subr.mxu0 0.0
    %612 = vmatpush1.msra.mxu0 0.0
    %613 = vmatprep.subr.mxu0 0.0
    %614 = vmatpush1.msra.mxu0 0.0
    %615 = vmatprep.subr.mxu0 0.0
    %616 = vmatpush1.msra.mxu0 0.0
    %617 = vmatprep.mubr.f32.mxu0 0.0
    %618 = vmatmul.mubr.f32.gmra.mrb[0].mxu0 %v551
    %v619 = vpop.f32.mrb[0].mxu0
    %v620 = vadd.f32 %v371, %v619
    %v621 = vpop.f32.mrb[0].mxu0
    %622 = vdwg.mxu0
    %v623 = vld [vmem:[%s10] sm:$0xff]
    %v624 = vld [vmem:[%s10 + $0x8] sm:$0xff]
    %v625 = vld [vmem:[#allocation11] sm:$0x1]
    %v627 = vlaneseq
    %v628 = vshrl.u32 %v627, 7
    %v629 = vsub.s32 0, %v628
    %v630 = vrot.slane %v625, %v629
    %v633 = vsel %vm549, %v620, 0
    %635 = vmatprep.subr.mxu0 0.0
    %636 = vmatpush1.msra.mxu0 %v623
    %637 = vmatprep.subr.mxu0 0.0
    %638 = vmatpush1.msra.mxu0 %v624
    %639 = vmatprep.subr.mxu0 0.0
    %640 = vmatpush1.msra.mxu0 0.0
    %641 = vmatprep.subr.mxu0 0.0
    %642 = vmatpush1.msra.mxu0 0.0
    %643 = vmatprep.subr.mxu0 0.0
    %644 = vmatpush1.msra.mxu0 0.0
    %645 = vmatprep.subr.mxu0 0.0
    %646 = vmatpush1.msra.mxu0 0.0
    %647 = vmatprep.subr.mxu0 0.0
    %648 = vmatpush1.msra.mxu0 0.0
    %649 = vmatprep.subr.mxu0 0.0
    %650 = vmatpush1.msra.mxu0 0.0
    %651 = vmatprep.subr.mxu0 0.0
    %652 = vmatpush1.msra.mxu0 0.0
    %653 = vmatprep.subr.mxu0 0.0
    %654 = vmatpush1.msra.mxu0 0.0
    %655 = vmatprep.subr.mxu0 0.0
    %656 = vmatpush1.msra.mxu0 0.0
    %657 = vmatprep.subr.mxu0 0.0
    %658 = vmatpush1.msra.mxu0 0.0
    %659 = vmatprep.subr.mxu0 0.0
    %660 = vmatpush1.msra.mxu0 0.0
    %661 = vmatprep.subr.mxu0 0.0
    %662 = vmatpush1.msra.mxu0 0.0
    %663 = vmatprep.subr.mxu0 0.0
    %664 = vmatpush1.msra.mxu0 0.0
    %665 = vmatprep.subr.mxu0 0.0
    %666 = vmatpush1.msra.mxu0 0.0
    %667 = vmatprep.subr.mxu0 0.0
    %668 = vmatpush1.msra.mxu0 0.0
    %669 = vmatprep.subr.mxu0 0.0
    %670 = vmatpush1.msra.mxu0 0.0
    %671 = vmatprep.subr.mxu0 0.0
    %672 = vmatpush1.msra.mxu0 0.0
    %673 = vmatprep.subr.mxu0 0.0
    %674 = vmatpush1.msra.mxu0 0.0
    %675 = vmatprep.subr.mxu0 0.0
    %676 = vmatpush1.msra.mxu0 0.0
    %677 = vmatprep.subr.mxu0 0.0
    %678 = vmatpush1.msra.mxu0 0.0
    %679 = vmatprep.subr.mxu0 0.0
    %680 = vmatpush1.msra.mxu0 0.0
    %681 = vmatprep.subr.mxu0 0.0
    %682 = vmatpush1.msra.mxu0 0.0
    %683 = vmatprep.subr.mxu0 0.0
    %684 = vmatpush1.msra.mxu0 0.0
    %685 = vmatprep.subr.mxu0 0.0
    %686 = vmatpush1.msra.mxu0 0.0
    %687 = vmatprep.subr.mxu0 0.0
    %688 = vmatpush1.msra.mxu0 0.0
    %689 = vmatprep.subr.mxu0 0.0
    %690 = vmatpush1.msra.mxu0 0.0
    %691 = vmatprep.subr.mxu0 0.0
    %692 = vmatpush1.msra.mxu0 0.0
    %693 = vmatprep.subr.mxu0 0.0
    %694 = vmatpush1.msra.mxu0 0.0
    %695 = vmatprep.subr.mxu0 0.0
    %696 = vmatpush1.msra.mxu0 0.0
    %697 = vmatprep.subr.mxu0 0.0
    %698 = vmatpush1.msra.mxu0 0.0
    %699 = vmatprep.mubr.f32.mxu0 0.0
    %700 = vmatmul.mubr.f32.gmra.mrb[0].mxu0 %v633
    %v701 = vpop.f32.mrb[0].mxu0
    %v702 = vadd.f32 %v630, %v701
    %v703 = vpop.f32.mrb[0].mxu0
    %704 = vdwg.mxu0
    %vm705 = vcmp.gt.f32.partialorder %v702, 0.0
    %v706 = vmul.f32 %v702, 0.01
    %v707 = vsel %vm705, %v702, %v706
    %v708 = vld [vmem:[%s12] sm:$0xff]
    %v709 = vld [vmem:[%s12 + $0x8] sm:$0xff]
    %v710 = vld [vmem:[#allocation13] sm:$0x1]
    %v712 = vlaneseq
    %v713 = vshrl.u32 %v712, 7
    %v714 = vsub.s32 0, %v713
    %v715 = vrot.slane %v710, %v714
    %v718 = vsel %vm549, %v707, 0
    %720 = vmatprep.subr.mxu0 0.0
    %721 = vmatpush1.msra.mxu0 %v708
    %722 = vmatprep.subr.mxu0 0.0
    %723 = vmatpush1.msra.mxu0 %v709
    %724 = vmatprep.subr.mxu0 0.0
    %725 = vmatpush1.msra.mxu0 0.0
    %726 = vmatprep.subr.mxu0 0.0
    %727 = vmatpush1.msra.mxu0 0.0
    %728 = vmatprep.subr.mxu0 0.0
    %729 = vmatpush1.msra.mxu0 0.0
    %730 = vmatprep.subr.mxu0 0.0
    %731 = vmatpush1.msra.mxu0 0.0
    %732 = vmatprep.subr.mxu0 0.0
    %733 = vmatpush1.msra.mxu0 0.0
    %734 = vmatprep.subr.mxu0 0.0
    %735 = vmatpush1.msra.mxu0 0.0
    %736 = vmatprep.subr.mxu0 0.0
    %737 = vmatpush1.msra.mxu0 0.0
    %738 = vmatprep.subr.mxu0 0.0
    %739 = vmatpush1.msra.mxu0 0.0
    %740 = vmatprep.subr.mxu0 0.0
    %741 = vmatpush1.msra.mxu0 0.0
    %742 = vmatprep.subr.mxu0 0.0
    %743 = vmatpush1.msra.mxu0 0.0
    %744 = vmatprep.subr.mxu0 0.0
    %745 = vmatpush1.msra.mxu0 0.0
    %746 = vmatprep.subr.mxu0 0.0
    %747 = vmatpush1.msra.mxu0 0.0
    %748 = vmatprep.subr.mxu0 0.0
    %749 = vmatpush1.msra.mxu0 0.0
    %750 = vmatprep.subr.mxu0 0.0
    %751 = vmatpush1.msra.mxu0 0.0
    %752 = vmatprep.subr.mxu0 0.0
    %753 = vmatpush1.msra.mxu0 0.0
    %754 = vmatprep.subr.mxu0 0.0
    %755 = vmatpush1.msra.mxu0 0.0
    %756 = vmatprep.subr.mxu0 0.0
    %757 = vmatpush1.msra.mxu0 0.0
    %758 = vmatprep.subr.mxu0 0.0
    %759 = vmatpush1.msra.mxu0 0.0
    %760 = vmatprep.subr.mxu0 0.0
    %761 = vmatpush1.msra.mxu0 0.0
    %762 = vmatprep.subr.mxu0 0.0
    %763 = vmatpush1.msra.mxu0 0.0
    %764 = vmatprep.subr.mxu0 0.0
    %765 = vmatpush1.msra.mxu0 0.0
    %766 = vmatprep.subr.mxu0 0.0
    %767 = vmatpush1.msra.mxu0 0.0
    %768 = vmatprep.subr.mxu0 0.0
    %769 = vmatpush1.msra.mxu0 0.0
    %770 = vmatprep.subr.mxu0 0.0
    %771 = vmatpush1.msra.mxu0 0.0
    %772 = vmatprep.subr.mxu0 0.0
    %773 = vmatpush1.msra.mxu0 0.0
    %774 = vmatprep.subr.mxu0 0.0
    %775 = vmatpush1.msra.mxu0 0.0
    %776 = vmatprep.subr.mxu0 0.0
    %777 = vmatpush1.msra.mxu0 0.0
    %778 = vmatprep.subr.mxu0 0.0
    %779 = vmatpush1.msra.mxu0 0.0
    %780 = vmatprep.subr.mxu0 0.0
    %781 = vmatpush1.msra.mxu0 0.0
    %782 = vmatprep.subr.mxu0 0.0
    %783 = vmatpush1.msra.mxu0 0.0
    %784 = vmatprep.mubr.f32.mxu0 0.0
    %785 = vmatmul.mubr.f32.gmra.mrb[0].mxu0 %v718
    %v786 = vpop.f32.mrb[0].mxu0
    %v787 = vadd.f32 %v715, %v786
    %v788 = vpop.f32.mrb[0].mxu0
    %789 = vdwg.mxu0
    %v790 = vtanh.pop %v787
    %v791 = vld [vmem:[%s14] sm:$0xff]
    %v792 = vld [vmem:[%s14 + $0x8] sm:$0xff]
    %v793 = vld [vmem:[%s15] sm:$0x1]
    %v795 = vlaneseq
    %v796 = vshrl.u32 %v795, 7
    %v797 = vsub.s32 0, %v796
    %v798 = vrot.slane %v793, %v797
    %v801 = vsel %vm549, %v371, 0
    %803 = vmatprep.subr.mxu0 0.0
    %804 = vmatpush1.msra.mxu0 %v791
    %805 = vmatprep.subr.mxu0 0.0
    %806 = vmatpush1.msra.mxu0 %v792
    %807 = vmatprep.subr.mxu0 0.0
    %808 = vmatpush1.msra.mxu0 0.0
    %809 = vmatprep.subr.mxu0 0.0
    %810 = vmatpush1.msra.mxu0 0.0
    %811 = vmatprep.subr.mxu0 0.0
    %812 = vmatpush1.msra.mxu0 0.0
    %813 = vmatprep.subr.mxu0 0.0
    %814 = vmatpush1.msra.mxu0 0.0
    %815 = vmatprep.subr.mxu0 0.0
    %816 = vmatpush1.msra.mxu0 0.0
    %817 = vmatprep.subr.mxu0 0.0
    %818 = vmatpush1.msra.mxu0 0.0
    %819 = vmatprep.subr.mxu0 0.0
    %820 = vmatpush1.msra.mxu0 0.0
    %821 = vmatprep.subr.mxu0 0.0
    %822 = vmatpush1.msra.mxu0 0.0
    %823 = vmatprep.subr.mxu0 0.0
    %824 = vmatpush1.msra.mxu0 0.0
    %825 = vmatprep.subr.mxu0 0.0
    %826 = vmatpush1.msra.mxu0 0.0
    %827 = vmatprep.subr.mxu0 0.0
    %828 = vmatpush1.msra.mxu0 0.0
    %829 = vmatprep.subr.mxu0 0.0
    %830 = vmatpush1.msra.mxu0 0.0
    %831 = vmatprep.subr.mxu0 0.0
    %832 = vmatpush1.msra.mxu0 0.0
    %833 = vmatprep.subr.mxu0 0.0
    %834 = vmatpush1.msra.mxu0 0.0
    %835 = vmatprep.subr.mxu0 0.0
    %836 = vmatpush1.msra.mxu0 0.0
    %837 = vmatprep.subr.mxu0 0.0
    %838 = vmatpush1.msra.mxu0 0.0
    %839 = vmatprep.subr.mxu0 0.0
    %840 = vmatpush1.msra.mxu0 0.0
    %841 = vmatprep.subr.mxu0 0.0
    %842 = vmatpush1.msra.mxu0 0.0
    %843 = vmatprep.subr.mxu0 0.0
    %844 = vmatpush1.msra.mxu0 0.0
    %845 = vmatprep.subr.mxu0 0.0
    %846 = vmatpush1.msra.mxu0 0.0
    %847 = vmatprep.subr.mxu0 0.0
    %848 = vmatpush1.msra.mxu0 0.0
    %849 = vmatprep.subr.mxu0 0.0
    %850 = vmatpush1.msra.mxu0 0.0
    %851 = vmatprep.subr.mxu0 0.0
    %852 = vmatpush1.msra.mxu0 0.0
    %853 = vmatprep.subr.mxu0 0.0
    %854 = vmatpush1.msra.mxu0 0.0
    %855 = vmatprep.subr.mxu0 0.0
    %856 = vmatpush1.msra.mxu0 0.0
    %857 = vmatprep.subr.mxu0 0.0
    %858 = vmatpush1.msra.mxu0 0.0
    %859 = vmatprep.subr.mxu0 0.0
    %860 = vmatpush1.msra.mxu0 0.0
    %861 = vmatprep.subr.mxu0 0.0
    %862 = vmatpush1.msra.mxu0 0.0
    %863 = vmatprep.subr.mxu0 0.0
    %864 = vmatpush1.msra.mxu0 0.0
    %865 = vmatprep.subr.mxu0 0.0
    %866 = vmatpush1.msra.mxu0 0.0
    %867 = vmatprep.mubr.f32.mxu0 0.0
    %868 = vmatmul.mubr.f32.gmra.mrb[0].mxu0 %v801
    %v869 = vpop.f32.mrb[0].mxu0
    %v870 = vadd.f32 %v798, %v869
    %v871 = vpop.f32.mrb[0].mxu0
    %872 = vdwg.mxu0
    %v873 = vtanh.pop %v870
    %v874 = vadd.f32 %v790, %v873
    %v875 = vld [vmem:[%s16] sm:$0x7]
    %v876 = vld [vmem:[%s17] sm:$0x1]
    %v878 = vlaneseq
    %v879 = vshrl.u32 %v878, 7
    %v880 = vsub.s32 0, %v879
    %v881 = vrot.slane %v876, %v880
    %v884 = vsel %vm387, %v875, 0
    %886 = vmatprep.subr.mxu0 0.0
    %887 = vmatpush1.msra.mxu0 %v884
    %888 = vmatprep.subr.mxu0 0.0
    %889 = vmatpush1.msra.mxu0 0.0
    %890 = vmatprep.subr.mxu0 0.0
    %891 = vmatpush1.msra.mxu0 0.0
    %892 = vmatprep.subr.mxu0 0.0
    %893 = vmatpush1.msra.mxu0 0.0
    %894 = vmatprep.subr.mxu0 0.0
    %895 = vmatpush1.msra.mxu0 0.0
    %896 = vmatprep.subr.mxu0 0.0
    %897 = vmatpush1.msra.mxu0 0.0
    %898 = vmatprep.subr.mxu0 0.0
    %899 = vmatpush1.msra.mxu0 0.0
    %900 = vmatprep.subr.mxu0 0.0
    %901 = vmatpush1.msra.mxu0 0.0
    %902 = vmatprep.subr.mxu0 0.0
    %903 = vmatpush1.msra.mxu0 0.0
    %904 = vmatprep.subr.mxu0 0.0
    %905 = vmatpush1.msra.mxu0 0.0
    %906 = vmatprep.subr.mxu0 0.0
    %907 = vmatpush1.msra.mxu0 0.0
    %908 = vmatprep.subr.mxu0 0.0
    %909 = vmatpush1.msra.mxu0 0.0
    %910 = vmatprep.subr.mxu0 0.0
    %911 = vmatpush1.msra.mxu0 0.0
    %912 = vmatprep.subr.mxu0 0.0
    %913 = vmatpush1.msra.mxu0 0.0
    %914 = vmatprep.subr.mxu0 0.0
    %915 = vmatpush1.msra.mxu0 0.0
    %916 = vmatprep.subr.mxu0 0.0
    %917 = vmatpush1.msra.mxu0 0.0
    %918 = vmatprep.subr.mxu0 0.0
    %919 = vmatpush1.msra.mxu0 0.0
    %920 = vmatprep.subr.mxu0 0.0
    %921 = vmatpush1.msra.mxu0 0.0
    %922 = vmatprep.subr.mxu0 0.0
    %923 = vmatpush1.msra.mxu0 0.0
    %924 = vmatprep.subr.mxu0 0.0
    %925 = vmatpush1.msra.mxu0 0.0
    %926 = vmatprep.subr.mxu0 0.0
    %927 = vmatpush1.msra.mxu0 0.0
    %928 = vmatprep.subr.mxu0 0.0
    %929 = vmatpush1.msra.mxu0 0.0
    %930 = vmatprep.subr.mxu0 0.0
    %931 = vmatpush1.msra.mxu0 0.0
    %932 = vmatprep.subr.mxu0 0.0
    %933 = vmatpush1.msra.mxu0 0.0
    %934 = vmatprep.subr.mxu0 0.0
    %935 = vmatpush1.msra.mxu0 0.0
    %936 = vmatprep.subr.mxu0 0.0
    %937 = vmatpush1.msra.mxu0 0.0
    %938 = vmatprep.subr.mxu0 0.0
    %939 = vmatpush1.msra.mxu0 0.0
    %940 = vmatprep.subr.mxu0 0.0
    %941 = vmatpush1.msra.mxu0 0.0
    %942 = vmatprep.subr.mxu0 0.0
    %943 = vmatpush1.msra.mxu0 0.0
    %944 = vmatprep.subr.mxu0 0.0
    %945 = vmatpush1.msra.mxu0 0.0
    %946 = vmatprep.subr.mxu0 0.0
    %947 = vmatpush1.msra.mxu0 0.0
    %948 = vmatprep.subr.mxu0 0.0
    %949 = vmatpush1.msra.mxu0 0.0
    %950 = vmatprep.mubr.f32.mxu0 0.0
    %951 = vmatmul.mubr.f32.gmra.mrb[0].mxu0 %v382
    %v952 = vpop.f32.mrb[0].mxu0
    %v953 = vadd.f32 %v881, %v952
    %v954 = vpop.f32.mrb[0].mxu0
    %955 = vmatprep.mubr.f32.mxu0 0.0
    %956 = vmatmul.mubr.f32.gmra.mrb[0].mxu0 %v385
    %v957 = vpop.f32.mrb[0].mxu0
    %v958 = vadd.f32 %v881, %v957
    %v959 = vpop.f32.mrb[0].mxu0
    %960 = vdwg.mxu0
    %961 = vmatprep.subr.mxu0 0.0
    %962 = vmatpush1.msra.mxu0 %v874
    %963 = vmatprep.subr.mxu0 0.0
    %964 = vmatpush1.msra.mxu0 0.0
    %965 = vmatprep.subr.mxu0 0.0
    %966 = vmatpush1.msra.mxu0 0.0
    %967 = vmatprep.subr.mxu0 0.0
    %968 = vmatpush1.msra.mxu0 0.0
    %969 = vmatprep.subr.mxu0 0.0
    %970 = vmatpush1.msra.mxu0 0.0
    %971 = vmatprep.subr.mxu0 0.0
    %972 = vmatpush1.msra.mxu0 0.0
    %973 = vmatprep.subr.mxu0 0.0
    %974 = vmatpush1.msra.mxu0 0.0
    %975 = vmatprep.subr.mxu0 0.0
    %976 = vmatpush1.msra.mxu0 0.0
    %977 = vmatprep.subr.mxu0 0.0
    %978 = vmatpush1.msra.mxu0 0.0
    %979 = vmatprep.subr.mxu0 0.0
    %980 = vmatpush1.msra.mxu0 0.0
    %981 = vmatprep.subr.mxu0 0.0
    %982 = vmatpush1.msra.mxu0 0.0
    %983 = vmatprep.subr.mxu0 0.0
    %984 = vmatpush1.msra.mxu0 0.0
    %985 = vmatprep.subr.mxu0 0.0
    %986 = vmatpush1.msra.mxu0 0.0
    %987 = vmatprep.subr.mxu0 0.0
    %988 = vmatpush1.msra.mxu0 0.0
    %989 = vmatprep.subr.mxu0 0.0
    %990 = vmatpush1.msra.mxu0 0.0
    %991 = vmatprep.subr.mxu0 0.0
    %992 = vmatpush1.msra.mxu0 0.0
    %993 = vmatprep.subr.mxu0 0.0
    %994 = vmatpush1.msra.mxu0 0.0
    %995 = vmatprep.subr.mxu0 0.0
    %996 = vmatpush1.msra.mxu0 0.0
    %997 = vmatprep.subr.mxu0 0.0
    %998 = vmatpush1.msra.mxu0 0.0
    %999 = vmatprep.subr.mxu0 0.0
    %1000 = vmatpush1.msra.mxu0 0.0
    %1001 = vmatprep.subr.mxu0 0.0
    %1002 = vmatpush1.msra.mxu0 0.0
    %1003 = vmatprep.subr.mxu0 0.0
    %1004 = vmatpush1.msra.mxu0 0.0
    %1005 = vmatprep.subr.mxu0 0.0
    %1006 = vmatpush1.msra.mxu0 0.0
    %1007 = vmatprep.subr.mxu0 0.0
    %1008 = vmatpush1.msra.mxu0 0.0
    %1009 = vmatprep.subr.mxu0 0.0
    %1010 = vmatpush1.msra.mxu0 0.0
    %1011 = vmatprep.subr.mxu0 0.0
    %1012 = vmatpush1.msra.mxu0 0.0
    %1013 = vmatprep.subr.mxu0 0.0
    %1014 = vmatpush1.msra.mxu0 0.0
    %1015 = vmatprep.subr.mxu0 0.0
    %1016 = vmatpush1.msra.mxu0 0.0
    %1017 = vmatprep.subr.mxu0 0.0
    %1018 = vmatpush1.msra.mxu0 0.0
    %1019 = vmatprep.subr.mxu0 0.0
    %1020 = vmatpush1.msra.mxu0 0.0
    %1021 = vmatprep.subr.mxu0 0.0
    %1022 = vmatpush1.msra.mxu0 0.0
    %1023 = vmatprep.subr.mxu0 0.0
    %1024 = vmatpush1.msra.mxu0 0.0
    %1025 = vmatprep.mubr.f32.mxu0 0.0
    %1026 = vmatmul.mubr.f32.gmra.mrb[0].mxu0 %v467
    %v1027 = vpop.f32.mrb[0].mxu0
    %v1028 = vadd.f32 %v953, %v1027
    %v1029 = vpop.f32.mrb[0].mxu0
    %1030 = vmatprep.mubr.f32.mxu0 0.0
    %1031 = vmatmul.mubr.f32.gmra.mrb[0].mxu0 %v470
    %v1032 = vpop.f32.mrb[0].mxu0
    %v1033 = vadd.f32 %v958, %v1032
    %v1034 = vpop.f32.mrb[0].mxu0
    %1035 = vdwg.mxu0
    %v1036 = vmax.f32 %v1028, 0.0
    %v1037 = vmax.f32 %v1033, 0.0
    %1038 = vmatprep.subr.mxu0 0.0
    %1039 = vmatpush1.msra.mxu0 %v1036
    %1040 = vmatprep.subr.mxu0 0.0
    %1041 = vmatpush1.msra.mxu0 %v1037
    %1042 = vmatprep.subr.mxu0 0.0
    %1043 = vmatpush1.msra.mxu0 0.0
    %1044 = vmatprep.subr.mxu0 0.0
    %1045 = vmatpush1.msra.mxu0 0.0
    %1046 = vmatprep.subr.mxu0 0.0
    %1047 = vmatpush1.msra.mxu0 0.0
    %1048 = vmatprep.subr.mxu0 0.0
    %1049 = vmatpush1.msra.mxu0 0.0
    %1050 = vmatprep.subr.mxu0 0.0
    %1051 = vmatpush1.msra.mxu0 0.0
    %1052 = vmatprep.subr.mxu0 0.0
    %1053 = vmatpush1.msra.mxu0 0.0
    %1054 = vmatprep.subr.mxu0 0.0
    %1055 = vmatpush1.msra.mxu0 0.0
    %1056 = vmatprep.subr.mxu0 0.0
    %1057 = vmatpush1.msra.mxu0 0.0
    %1058 = vmatprep.subr.mxu0 0.0
    %1059 = vmatpush1.msra.mxu0 0.0
    %1060 = vmatprep.subr.mxu0 0.0
    %1061 = vmatpush1.msra.mxu0 0.0
    %1062 = vmatprep.subr.mxu0 0.0
    %1063 = vmatpush1.msra.mxu0 0.0
    %1064 = vmatprep.subr.mxu0 0.0
    %1065 = vmatpush1.msra.mxu0 0.0
    %1066 = vmatprep.subr.mxu0 0.0
    %1067 = vmatpush1.msra.mxu0 0.0
    %1068 = vmatprep.subr.mxu0 0.0
    %1069 = vmatpush1.msra.mxu0 0.0
    %1070 = vmatprep.subr.mxu0 0.0
    %1071 = vmatpush1.msra.mxu0 0.0
    %1072 = vmatprep.subr.mxu0 0.0
    %1073 = vmatpush1.msra.mxu0 0.0
    %1074 = vmatprep.subr.mxu0 0.0
    %1075 = vmatpush1.msra.mxu0 0.0
    %1076 = vmatprep.subr.mxu0 0.0
    %1077 = vmatpush1.msra.mxu0 0.0
    %1078 = vmatprep.subr.mxu0 0.0
    %1079 = vmatpush1.msra.mxu0 0.0
    %1080 = vmatprep.subr.mxu0 0.0
    %1081 = vmatpush1.msra.mxu0 0.0
    %1082 = vmatprep.subr.mxu0 0.0
    %1083 = vmatpush1.msra.mxu0 0.0
    %1084 = vmatprep.subr.mxu0 0.0
    %1085 = vmatpush1.msra.mxu0 0.0
    %1086 = vmatprep.subr.mxu0 0.0
    %1087 = vmatpush1.msra.mxu0 0.0
    %1088 = vmatprep.subr.mxu0 0.0
    %1089 = vmatpush1.msra.mxu0 0.0
    %1090 = vmatprep.subr.mxu0 0.0
    %1091 = vmatpush1.msra.mxu0 0.0
    %1092 = vmatprep.subr.mxu0 0.0
    %1093 = vmatpush1.msra.mxu0 0.0
    %1094 = vmatprep.subr.mxu0 0.0
    %1095 = vmatpush1.msra.mxu0 0.0
    %1096 = vmatprep.subr.mxu0 0.0
    %1097 = vmatpush1.msra.mxu0 0.0
    %1098 = vmatprep.subr.mxu0 0.0
    %1099 = vmatpush1.msra.mxu0 0.0
    %1100 = vmatprep.subr.mxu0 0.0
    %1101 = vmatpush1.msra.mxu0 0.0
    %1102 = vmatprep.mubr.f32.mxu0 0.0
    %1103 = vmatmul.mubr.f32.gmra.mrb[0].mxu0 %v551
    %v1104 = vpop.f32.mrb[0].mxu0
    %v1105 = vadd.f32 %v874, %v1104
    %v1106 = vpop.f32.mrb[0].mxu0
    %1107 = vdwg.mxu0
    %v1108 = vld [vmem:[%s18] sm:$0xff]
    %v1109 = vld [vmem:[%s18 + $0x8] sm:$0xff]
    %v1110 = vld [vmem:[%s19] sm:$0x1]
    %v1112 = vlaneseq
    %v1113 = vshrl.u32 %v1112, 7
    %v1114 = vsub.s32 0, %v1113
    %v1115 = vrot.slane %v1110, %v1114
    %v1118 = vsel %vm549, %v1105, 0
    %1120 = vmatprep.subr.mxu0 0.0
    %1121 = vmatpush1.msra.mxu0 %v1108
    %1122 = vmatprep.subr.mxu0 0.0
    %1123 = vmatpush1.msra.mxu0 %v1109
    %1124 = vmatprep.subr.mxu0 0.0
    %1125 = vmatpush1.msra.mxu0 0.0
    %1126 = vmatprep.subr.mxu0 0.0
    %1127 = vmatpush1.msra.mxu0 0.0
    %1128 = vmatprep.subr.mxu0 0.0
    %1129 = vmatpush1.msra.mxu0 0.0
    %1130 = vmatprep.subr.mxu0 0.0
    %1131 = vmatpush1.msra.mxu0 0.0
    %1132 = vmatprep.subr.mxu0 0.0
    %1133 = vmatpush1.msra.mxu0 0.0
    %1134 = vmatprep.subr.mxu0 0.0
    %1135 = vmatpush1.msra.mxu0 0.0
    %1136 = vmatprep.subr.mxu0 0.0
    %1137 = vmatpush1.msra.mxu0 0.0
    %1138 = vmatprep.subr.mxu0 0.0
    %1139 = vmatpush1.msra.mxu0 0.0
    %1140 = vmatprep.subr.mxu0 0.0
    %1141 = vmatpush1.msra.mxu0 0.0
    %1142 = vmatprep.subr.mxu0 0.0
    %1143 = vmatpush1.msra.mxu0 0.0
    %1144 = vmatprep.subr.mxu0 0.0
    %1145 = vmatpush1.msra.mxu0 0.0
    %1146 = vmatprep.subr.mxu0 0.0
    %1147 = vmatpush1.msra.mxu0 0.0
    %1148 = vmatprep.subr.mxu0 0.0
    %1149 = vmatpush1.msra.mxu0 0.0
    %1150 = vmatprep.subr.mxu0 0.0
    %1151 = vmatpush1.msra.mxu0 0.0
    %1152 = vmatprep.subr.mxu0 0.0
    %1153 = vmatpush1.msra.mxu0 0.0
    %1154 = vmatprep.subr.mxu0 0.0
    %1155 = vmatpush1.msra.mxu0 0.0
    %1156 = vmatprep.subr.mxu0 0.0
    %1157 = vmatpush1.msra.mxu0 0.0
    %1158 = vmatprep.subr.mxu0 0.0
    %1159 = vmatpush1.msra.mxu0 0.0
    %1160 = vmatprep.subr.mxu0 0.0
    %1161 = vmatpush1.msra.mxu0 0.0
    %1162 = vmatprep.subr.mxu0 0.0
    %1163 = vmatpush1.msra.mxu0 0.0
    %1164 = vmatprep.subr.mxu0 0.0
    %1165 = vmatpush1.msra.mxu0 0.0
    %1166 = vmatprep.subr.mxu0 0.0
    %1167 = vmatpush1.msra.mxu0 0.0
    %1168 = vmatprep.subr.mxu0 0.0
    %1169 = vmatpush1.msra.mxu0 0.0
    %1170 = vmatprep.subr.mxu0 0.0
    %1171 = vmatpush1.msra.mxu0 0.0
    %1172 = vmatprep.subr.mxu0 0.0
    %1173 = vmatpush1.msra.mxu0 0.0
    %1174 = vmatprep.subr.mxu0 0.0
    %1175 = vmatpush1.msra.mxu0 0.0
    %1176 = vmatprep.subr.mxu0 0.0
    %1177 = vmatpush1.msra.mxu0 0.0
    %1178 = vmatprep.subr.mxu0 0.0
    %1179 = vmatpush1.msra.mxu0 0.0
    %1180 = vmatprep.subr.mxu0 0.0
    %1181 = vmatpush1.msra.mxu0 0.0
    %1182 = vmatprep.subr.mxu0 0.0
    %1183 = vmatpush1.msra.mxu0 0.0
    %1184 = vmatprep.mubr.f32.mxu0 0.0
    %1185 = vmatmul.mubr.f32.gmra.mrb[0].mxu0 %v1118
    %v1186 = vpop.f32.mrb[0].mxu0
    %v1187 = vadd.f32 %v1115, %v1186
    %v1188 = vpop.f32.mrb[0].mxu0
    %1189 = vdwg.mxu0
    %vm1190 = vcmp.gt.f32.partialorder %v1187, 0.0
    %v1191 = vmul.f32 %v1187, 0.01
    %v1192 = vsel %vm1190, %v1187, %v1191
    %v1193 = vld [vmem:[%s20] sm:$0xff]
    %v1194 = vld [vmem:[%s20 + $0x8] sm:$0xff]
    %v1195 = vld [vmem:[%s21] sm:$0x1]
    %v1197 = vlaneseq
    %v1198 = vshrl.u32 %v1197, 7
    %v1199 = vsub.s32 0, %v1198
    %v1200 = vrot.slane %v1195, %v1199
    %v1203 = vsel %vm549, %v1192, 0
    %1205 = vmatprep.subr.mxu0 0.0
    %1206 = vmatpush1.msra.mxu0 %v1193
    %1207 = vmatprep.subr.mxu0 0.0
    %1208 = vmatpush1.msra.mxu0 %v1194
    %1209 = vmatprep.subr.mxu0 0.0
    %1210 = vmatpush1.msra.mxu0 0.0
    %1211 = vmatprep.subr.mxu0 0.0
    %1212 = vmatpush1.msra.mxu0 0.0
    %1213 = vmatprep.subr.mxu0 0.0
    %1214 = vmatpush1.msra.mxu0 0.0
    %1215 = vmatprep.subr.mxu0 0.0
    %1216 = vmatpush1.msra.mxu0 0.0
    %1217 = vmatprep.subr.mxu0 0.0
    %1218 = vmatpush1.msra.mxu0 0.0
    %1219 = vmatprep.subr.mxu0 0.0
    %1220 = vmatpush1.msra.mxu0 0.0
    %1221 = vmatprep.subr.mxu0 0.0
    %1222 = vmatpush1.msra.mxu0 0.0
    %1223 = vmatprep.subr.mxu0 0.0
    %1224 = vmatpush1.msra.mxu0 0.0
    %1225 = vmatprep.subr.mxu0 0.0
    %1226 = vmatpush1.msra.mxu0 0.0
    %1227 = vmatprep.subr.mxu0 0.0
    %1228 = vmatpush1.msra.mxu0 0.0
    %1229 = vmatprep.subr.mxu0 0.0
    %1230 = vmatpush1.msra.mxu0 0.0
    %1231 = vmatprep.subr.mxu0 0.0
    %1232 = vmatpush1.msra.mxu0 0.0
    %1233 = vmatprep.subr.mxu0 0.0
    %1234 = vmatpush1.msra.mxu0 0.0
    %1235 = vmatprep.subr.mxu0 0.0
    %1236 = vmatpush1.msra.mxu0 0.0
    %1237 = vmatprep.subr.mxu0 0.0
    %1238 = vmatpush1.msra.mxu0 0.0
    %1239 = vmatprep.subr.mxu0 0.0
    %1240 = vmatpush1.msra.mxu0 0.0
    %1241 = vmatprep.subr.mxu0 0.0
    %1242 = vmatpush1.msra.mxu0 0.0
    %1243 = vmatprep.subr.mxu0 0.0
    %1244 = vmatpush1.msra.mxu0 0.0
    %1245 = vmatprep.subr.mxu0 0.0
    %1246 = vmatpush1.msra.mxu0 0.0
    %1247 = vmatprep.subr.mxu0 0.0
    %1248 = vmatpush1.msra.mxu0 0.0
    %1249 = vmatprep.subr.mxu0 0.0
    %1250 = vmatpush1.msra.mxu0 0.0
    %1251 = vmatprep.subr.mxu0 0.0
    %1252 = vmatpush1.msra.mxu0 0.0
    %1253 = vmatprep.subr.mxu0 0.0
    %1254 = vmatpush1.msra.mxu0 0.0
    %1255 = vmatprep.subr.mxu0 0.0
    %1256 = vmatpush1.msra.mxu0 0.0
    %1257 = vmatprep.subr.mxu0 0.0
    %1258 = vmatpush1.msra.mxu0 0.0
    %1259 = vmatprep.subr.mxu0 0.0
    %1260 = vmatpush1.msra.mxu0 0.0
    %1261 = vmatprep.subr.mxu0 0.0
    %1262 = vmatpush1.msra.mxu0 0.0
    %1263 = vmatprep.subr.mxu0 0.0
    %1264 = vmatpush1.msra.mxu0 0.0
    %1265 = vmatprep.subr.mxu0 0.0
    %1266 = vmatpush1.msra.mxu0 0.0
    %1267 = vmatprep.subr.mxu0 0.0
    %1268 = vmatpush1.msra.mxu0 0.0
    %1269 = vmatprep.mubr.f32.mxu0 0.0
    %1270 = vmatmul.mubr.f32.gmra.mrb[0].mxu0 %v1203
    %v1271 = vpop.f32.mrb[0].mxu0
    %v1272 = vadd.f32 %v1200, %v1271
    %v1273 = vpop.f32.mrb[0].mxu0
    %1274 = vdwg.mxu0
    %v1275 = vtanh.pop %v1272
    %v1276 = vld [vmem:[%s22] sm:$0xff]
    %v1277 = vld [vmem:[%s22 + $0x8] sm:$0xff]
    %v1278 = vld [vmem:[%s23] sm:$0x1]
    %v1280 = vlaneseq
    %v1281 = vshrl.u32 %v1280, 7
    %v1282 = vsub.s32 0, %v1281
    %v1283 = vrot.slane %v1278, %v1282
    %v1286 = vsel %vm549, %v874, 0
    %1288 = vmatprep.subr.mxu0 0.0
    %1289 = vmatpush1.msra.mxu0 %v1276
    %1290 = vmatprep.subr.mxu0 0.0
    %1291 = vmatpush1.msra.mxu0 %v1277
    %1292 = vmatprep.subr.mxu0 0.0
    %1293 = vmatpush1.msra.mxu0 0.0
    %1294 = vmatprep.subr.mxu0 0.0
    %1295 = vmatpush1.msra.mxu0 0.0
    %1296 = vmatprep.subr.mxu0 0.0
    %1297 = vmatpush1.msra.mxu0 0.0
    %1298 = vmatprep.subr.mxu0 0.0
    %1299 = vmatpush1.msra.mxu0 0.0
    %1300 = vmatprep.subr.mxu0 0.0
    %1301 = vmatpush1.msra.mxu0 0.0
    %1302 = vmatprep.subr.mxu0 0.0
    %1303 = vmatpush1.msra.mxu0 0.0
    %1304 = vmatprep.subr.mxu0 0.0
    %1305 = vmatpush1.msra.mxu0 0.0
    %1306 = vmatprep.subr.mxu0 0.0
    %1307 = vmatpush1.msra.mxu0 0.0
    %1308 = vmatprep.subr.mxu0 0.0
    %1309 = vmatpush1.msra.mxu0 0.0
    %1310 = vmatprep.subr.mxu0 0.0
    %1311 = vmatpush1.msra.mxu0 0.0
    %1312 = vmatprep.subr.mxu0 0.0
    %1313 = vmatpush1.msra.mxu0 0.0
    %1314 = vmatprep.subr.mxu0 0.0
    %1315 = vmatpush1.msra.mxu0 0.0
    %1316 = vmatprep.subr.mxu0 0.0
    %1317 = vmatpush1.msra.mxu0 0.0
    %1318 = vmatprep.subr.mxu0 0.0
    %1319 = vmatpush1.msra.mxu0 0.0
    %1320 = vmatprep.subr.mxu0 0.0
    %1321 = vmatpush1.msra.mxu0 0.0
    %1322 = vmatprep.subr.mxu0 0.0
    %1323 = vmatpush1.msra.mxu0 0.0
    %1324 = vmatprep.subr.mxu0 0.0
    %1325 = vmatpush1.msra.mxu0 0.0
    %1326 = vmatprep.subr.mxu0 0.0
    %1327 = vmatpush1.msra.mxu0 0.0
    %1328 = vmatprep.subr.mxu0 0.0
    %1329 = vmatpush1.msra.mxu0 0.0
    %1330 = vmatprep.subr.mxu0 0.0
    %1331 = vmatpush1.msra.mxu0 0.0
    %1332 = vmatprep.subr.mxu0 0.0
    %1333 = vmatpush1.msra.mxu0 0.0
    %1334 = vmatprep.subr.mxu0 0.0
    %1335 = vmatpush1.msra.mxu0 0.0
    %1336 = vmatprep.subr.mxu0 0.0
    %1337 = vmatpush1.msra.mxu0 0.0
    %1338 = vmatprep.subr.mxu0 0.0
    %1339 = vmatpush1.msra.mxu0 0.0
    %1340 = vmatprep.subr.mxu0 0.0
    %1341 = vmatpush1.msra.mxu0 0.0
    %1342 = vmatprep.subr.mxu0 0.0
    %1343 = vmatpush1.msra.mxu0 0.0
    %1344 = vmatprep.subr.mxu0 0.0
    %1345 = vmatpush1.msra.mxu0 0.0
    %1346 = vmatprep.subr.mxu0 0.0
    %1347 = vmatpush1.msra.mxu0 0.0
    %1348 = vmatprep.subr.mxu0 0.0
    %1349 = vmatpush1.msra.mxu0 0.0
    %1350 = vmatprep.subr.mxu0 0.0
    %1351 = vmatpush1.msra.mxu0 0.0
    %1352 = vmatprep.mubr.f32.mxu0 0.0
    %1353 = vmatmul.mubr.f32.gmra.mrb[0].mxu0 %v1286
    %v1354 = vpop.f32.mrb[0].mxu0
    %v1355 = vadd.f32 %v1283, %v1354
    %v1356 = vpop.f32.mrb[0].mxu0
    %1357 = vdwg.mxu0
    %v1358 = vtanh.pop %v1355
    %v1359 = vadd.f32 %v1275, %v1358
    %v1360 = vld [vmem:[%s24] sm:$0xff]
    %v1361 = vld [vmem:[%s24 + $0x8] sm:$0xff]
    %v1362 = vld [vmem:[%s25] sm:$0x1]
    %v1364 = vlaneseq
    %v1365 = vshrl.u32 %v1364, 7
    %v1366 = vsub.s32 0, %v1365
    %v1367 = vrot.slane %v1362, %v1366
    %v1370 = vsel %vm549, %v1359, 0
    %1372 = vmatprep.subr.mxu0 0.0
    %1373 = vmatpush1.msra.mxu0 %v1360
    %1374 = vmatprep.subr.mxu0 0.0
    %1375 = vmatpush1.msra.mxu0 %v1361
    %1376 = vmatprep.subr.mxu0 0.0
    %1377 = vmatpush1.msra.mxu0 0.0
    %1378 = vmatprep.subr.mxu0 0.0
    %1379 = vmatpush1.msra.mxu0 0.0
    %1380 = vmatprep.subr.mxu0 0.0
    %1381 = vmatpush1.msra.mxu0 0.0
    %1382 = vmatprep.subr.mxu0 0.0
    %1383 = vmatpush1.msra.mxu0 0.0
    %1384 = vmatprep.subr.mxu0 0.0
    %1385 = vmatpush1.msra.mxu0 0.0
    %1386 = vmatprep.subr.mxu0 0.0
    %1387 = vmatpush1.msra.mxu0 0.0
    %1388 = vmatprep.subr.mxu0 0.0
    %1389 = vmatpush1.msra.mxu0 0.0
    %1390 = vmatprep.subr.mxu0 0.0
    %1391 = vmatpush1.msra.mxu0 0.0
    %1392 = vmatprep.subr.mxu0 0.0
    %1393 = vmatpush1.msra.mxu0 0.0
    %1394 = vmatprep.subr.mxu0 0.0
    %1395 = vmatpush1.msra.mxu0 0.0
    %1396 = vmatprep.subr.mxu0 0.0
    %1397 = vmatpush1.msra.mxu0 0.0
    %1398 = vmatprep.subr.mxu0 0.0
    %1399 = vmatpush1.msra.mxu0 0.0
    %1400 = vmatprep.subr.mxu0 0.0
    %1401 = vmatpush1.msra.mxu0 0.0
    %1402 = vmatprep.subr.mxu0 0.0
    %1403 = vmatpush1.msra.mxu0 0.0
    %1404 = vmatprep.subr.mxu0 0.0
    %1405 = vmatpush1.msra.mxu0 0.0
    %1406 = vmatprep.subr.mxu0 0.0
    %1407 = vmatpush1.msra.mxu0 0.0
    %1408 = vmatprep.subr.mxu0 0.0
    %1409 = vmatpush1.msra.mxu0 0.0
    %1410 = vmatprep.subr.mxu0 0.0
    %1411 = vmatpush1.msra.mxu0 0.0
    %1412 = vmatprep.subr.mxu0 0.0
    %1413 = vmatpush1.msra.mxu0 0.0
    %1414 = vmatprep.subr.mxu0 0.0
    %1415 = vmatpush1.msra.mxu0 0.0
    %1416 = vmatprep.subr.mxu0 0.0
    %1417 = vmatpush1.msra.mxu0 0.0
    %1418 = vmatprep.subr.mxu0 0.0
    %1419 = vmatpush1.msra.mxu0 0.0
    %1420 = vmatprep.subr.mxu0 0.0
    %1421 = vmatpush1.msra.mxu0 0.0
    %1422 = vmatprep.subr.mxu0 0.0
    %1423 = vmatpush1.msra.mxu0 0.0
    %1424 = vmatprep.subr.mxu0 0.0
    %1425 = vmatpush1.msra.mxu0 0.0
    %1426 = vmatprep.subr.mxu0 0.0
    %1427 = vmatpush1.msra.mxu0 0.0
    %1428 = vmatprep.subr.mxu0 0.0
    %1429 = vmatpush1.msra.mxu0 0.0
    %1430 = vmatprep.subr.mxu0 0.0
    %1431 = vmatpush1.msra.mxu0 0.0
    %1432 = vmatprep.subr.mxu0 0.0
    %1433 = vmatpush1.msra.mxu0 0.0
    %1434 = vmatprep.subr.mxu0 0.0
    %1435 = vmatpush1.msra.mxu0 0.0
    %1436 = vmatprep.mubr.f32.mxu0 0.0
    %1437 = vmatmul.mubr.f32.gmra.mrb[0].mxu0 %v1370
    %v1438 = vpop.f32.mrb[0].mxu0
    %v1439 = vadd.f32 %v1367, %v1438
    %v1440 = vpop.f32.mrb[0].mxu0
    %1441 = vdwg.mxu0
    %vm1442 = vcmp.gt.f32.partialorder %v1439, 0.0
    %v1443 = vmul.f32 %v1439, 0.01
    %v1444 = vsel %vm1442, %v1439, %v1443
    %v1445 = vld [vmem:[%s26] sm:$0xff]
    %v1446 = vld [vmem:[%s26 + $0x8] sm:$0xff]
    %v1447 = vld [vmem:[%s27] sm:$0x1]
    %v1449 = vlaneseq
    %v1450 = vshrl.u32 %v1449, 7
    %v1451 = vsub.s32 0, %v1450
    %v1452 = vrot.slane %v1447, %v1451
    %v1455 = vsel %vm549, %v1444, 0
    %1457 = vmatprep.subr.mxu0 0.0
    %1458 = vmatpush1.msra.mxu0 %v1445
    %1459 = vmatprep.subr.mxu0 0.0
    %1460 = vmatpush1.msra.mxu0 %v1446
    %1461 = vmatprep.subr.mxu0 0.0
    %1462 = vmatpush1.msra.mxu0 0.0
    %1463 = vmatprep.subr.mxu0 0.0
    %1464 = vmatpush1.msra.mxu0 0.0
    %1465 = vmatprep.subr.mxu0 0.0
    %1466 = vmatpush1.msra.mxu0 0.0
    %1467 = vmatprep.subr.mxu0 0.0
    %1468 = vmatpush1.msra.mxu0 0.0
    %1469 = vmatprep.subr.mxu0 0.0
    %1470 = vmatpush1.msra.mxu0 0.0
    %1471 = vmatprep.subr.mxu0 0.0
    %1472 = vmatpush1.msra.mxu0 0.0
    %1473 = vmatprep.subr.mxu0 0.0
    %1474 = vmatpush1.msra.mxu0 0.0
    %1475 = vmatprep.subr.mxu0 0.0
    %1476 = vmatpush1.msra.mxu0 0.0
    %1477 = vmatprep.subr.mxu0 0.0
    %1478 = vmatpush1.msra.mxu0 0.0
    %1479 = vmatprep.subr.mxu0 0.0
    %1480 = vmatpush1.msra.mxu0 0.0
    %1481 = vmatprep.subr.mxu0 0.0
    %1482 = vmatpush1.msra.mxu0 0.0
    %1483 = vmatprep.subr.mxu0 0.0
    %1484 = vmatpush1.msra.mxu0 0.0
    %1485 = vmatprep.subr.mxu0 0.0
    %1486 = vmatpush1.msra.mxu0 0.0
    %1487 = vmatprep.subr.mxu0 0.0
    %1488 = vmatpush1.msra.mxu0 0.0
    %1489 = vmatprep.subr.mxu0 0.0
    %1490 = vmatpush1.msra.mxu0 0.0
    %1491 = vmatprep.subr.mxu0 0.0
    %1492 = vmatpush1.msra.mxu0 0.0
    %1493 = vmatprep.subr.mxu0 0.0
    %1494 = vmatpush1.msra.mxu0 0.0
    %1495 = vmatprep.subr.mxu0 0.0
    %1496 = vmatpush1.msra.mxu0 0.0
    %1497 = vmatprep.subr.mxu0 0.0
    %1498 = vmatpush1.msra.mxu0 0.0
    %1499 = vmatprep.subr.mxu0 0.0
    %1500 = vmatpush1.msra.mxu0 0.0
    %1501 = vmatprep.subr.mxu0 0.0
    %1502 = vmatpush1.msra.mxu0 0.0
    %1503 = vmatprep.subr.mxu0 0.0
    %1504 = vmatpush1.msra.mxu0 0.0
    %1505 = vmatprep.subr.mxu0 0.0
    %1506 = vmatpush1.msra.mxu0 0.0
    %1507 = vmatprep.subr.mxu0 0.0
    %1508 = vmatpush1.msra.mxu0 0.0
    %1509 = vmatprep.subr.mxu0 0.0
    %1510 = vmatpush1.msra.mxu0 0.0
    %1511 = vmatprep.subr.mxu0 0.0
    %1512 = vmatpush1.msra.mxu0 0.0
    %1513 = vmatprep.subr.mxu0 0.0
    %1514 = vmatpush1.msra.mxu0 0.0
    %1515 = vmatprep.subr.mxu0 0.0
    %1516 = vmatpush1.msra.mxu0 0.0
    %1517 = vmatprep.subr.mxu0 0.0
    %1518 = vmatpush1.msra.mxu0 0.0
    %1519 = vmatprep.subr.mxu0 0.0
    %1520 = vmatpush1.msra.mxu0 0.0
    %1521 = vmatprep.mubr.f32.mxu0 0.0
    %1522 = vmatmul.mubr.f32.gmra.mrb[0].mxu0 %v1455
    %v1523 = vpop.f32.mrb[0].mxu0
    %v1524 = vadd.f32 %v1452, %v1523
    %v1525 = vpop.f32.mrb[0].mxu0
    %1526 = vdwg.mxu0
    %v1527 = vtanh.pop %v1524
    %1528 = vst.msk [vmem:[#allocation14] sm:$0xff] %vm297, %v1527
    // Predicated region
    $region142: #{tpu_custom_call.1} parent=1 // pred_check
      _
    $region143: #{tpu_custom_call.1} parent=1 // pred_check_branch
      %1530 = sbr.rel (0) target = $region145
    $region144: #{tpu_custom_call.1} parent=1 // pred_region
      %s1532 = ssub.s32 128, 128
      %1533 = vsyncadd [#allocation4], %s1532
      %s1535 = sshll.u32 [#allocation14], 4
      %s1536 = int_to_ptr.vmem [resolvable:$true] %s1535
      %1538 = dma.vmem_to_hbm [thread:$0]  %s1536, 128, %s28, [#allocation4]
    $region145: #{tpu_custom_call.1} parent=1 // pred_fallthru
      _
    // Predicated region
    $region146: #{tpu_custom_call.1} parent=1 // pred_check
      _
    $region147: #{tpu_custom_call.1} parent=1 // pred_check_branch
      %1540 = sbr.rel (0) target = $region149
    $region148: #{tpu_custom_call.1} parent=1 // pred_region
      %1541 = dma.done [#allocation4], 128
    $region149: #{tpu_custom_call.1} parent=1 // pred_fallthru
      _
    %1542 = vsyncpa [#allocation3], 1
    %1543 = vsyncpa [#allocation6], 1
    %1544 = vsyncpa [#allocation9], 1
    %1545 = vsyncpa [#allocation12], 1
    %1546 = vsyncpa [#allocation4], 1

</llo_original>
